<compile_context>
chip_gen: v7x
topology: tpu7x:2x2x1
jax: 0.10.0
libtpu: 0.0.40
codegen_flags: <defaults>
</compile_context>

<pallas_src>
import functools

import jax
import jax.numpy as jnp
from jax.experimental import pallas as pl
from jax.experimental.pallas import tpu as pltpu


def _round_up(v, m):
    return ((v + m - 1) // m) * m


def _vmem_capacity_bytes():
    """Per-core VMEM capacity; conservative fallback (v7x per-TC) if the query fails."""
    try:
        cap = int(pltpu.get_tpu_info().vmem_capacity_bytes)
        if cap > 0:
            return cap
    except Exception:
        pass
    return 64 * 1024 * 1024


def _pick_tm(m_rows, cin, lanes, budget):
    """Largest row tile whose pass-1 working set (double-buffered bf16 input/output
    tiles, f32 temporaries, resident bf16 weight block) fits the VMEM budget."""
    per_row = 2 * (4 * cin * 2) + 2 * (lanes * 2) + 2 * (lanes * 4)   # x4 db + out db + f32 temps
    fixed = 2 * (4 * cin * lanes * 2) + 2 * (16 * lanes * 4) + (1 << 18)
    tm = 1024                       # >=512-row tiles reach ~85% of HBM roofline
    while tm > 16 and fixed + tm * per_row > budget:
        tm //= 2
    # Keep >= 2 row tiles when possible so the leading stats-group axis can shard across
    # two TensorCores and the software pipeline has more than one stage.
    half_rows = _round_up(max((m_rows + 1) // 2, 16), 16)
    return max(16, min(tm, half_rows))


# ---------------------------------------------------------------------------
# Pass 1: sub-pixel transposed conv as ONE fused matmul + BN batch-stat partials
# ---------------------------------------------------------------------------
def _conv_stats_kernel(x4_ref, w_ref, o_ref, stats_ref):
    i = pl.program_id(1)

    @pl.when(i == 0)
    def _():
        stats_ref[...] = jnp.zeros_like(stats_ref)

    # One MXU-filling matmul: K = 4*Cin (four shifted copies of x stacked on lanes),
    # N = 4*Cp (four output-pixel parities [ee|eo|oe|oo], each Cout zero-padded).
    y = jnp.dot(x4_ref[...], w_ref[...], preferred_element_type=jnp.float32)   # (tm, L) f32
    o_ref[...] = y.astype(o_ref.dtype)

    # f32 BN partial sums kept as full (8, L) sublane slabs -> unmasked stores,
    # accumulated directly into the resident stats output block.
    y8 = y.reshape(y.shape[0] // 8, 8, y.shape[1])
    stats_ref[0:8, :] = stats_ref[0:8, :] + jnp.sum(y8, axis=0)
    stats_ref[8:16, :] = stats_ref[8:16, :] + jnp.sum(y8 * y8, axis=0)


# ---------------------------------------------------------------------------
# Pass 2: elementwise BatchNorm (scale/shift pre-folded) + activation
# ---------------------------------------------------------------------------
def _bn_act_kernel(y_ref, scale_ref, shift_ref, o_ref, *, last):
    y = y_ref[...].astype(jnp.float32) * scale_ref[...] + shift_ref[...]
    if last:
        o_ref[...] = jnp.tanh(y).astype(o_ref.dtype)
    else:
        o_ref[...] = jnp.where(y > 0, y, jnp.float32(0.01) * y).astype(o_ref.dtype)   # LeakyReLU


def deconv_block(x, weight, bias, gamma, beta, *, last=False, eps=1e-5):
    """x: (N, Cin, H, W); weight: (Cin, Cout, 3, 3) (PyTorch ConvTranspose2d layout);
    bias/gamma/beta: (Cout,).  Returns (N, Cout, 2H, 2W) float32.

    NOTE: the ConvTranspose bias is dropped because BatchNorm uses train-mode batch
    statistics, under which a per-channel constant cancels exactly.  Re-add it if this
    is ever run with running (eval-mode) statistics."""
    del bias
    N, Cin, H, W = x.shape
    Cout = weight.shape[1]
    Mrows = N * H * W

    Cp = _round_up(Cout, 32)       # 4 * Cp is a multiple of 128 -> lane-dense tiles
    L = 4 * Cp

    # --- generation-aware VMEM sizing ---
    vmem_cap = _vmem_capacity_bytes()
    budget = min(int(vmem_cap * 0.40), 56 << 20)
    vmem_limit = int(vmem_cap * 0.65)

    tm = _pick_tm(Mrows, Cin, L, budget)
    n_tiles = pl.cdiv(Mrows, tm)
    G = 2 if n_tiles >= 2 else 1           # stats groups; "parallel" axis (megacore)
    Mt = pl.cdiv(n_tiles, G)               # row tiles per group
    M_pad = G * Mt * tm

    # --- glue: one bf16 (M_pad, 4*Cin) buffer holding the four shifted copies of x ---
    # TODO(synk): accept NHWC activations from the surrounding model to drop this transpose.
    xf = jnp.transpose(x.astype(jnp.bfloat16), (0, 2, 3, 1))        # (N, H, W, Cin)
    xp = jnp.pad(xf, ((0, 0), (0, 1), (0, 1), (0, 0)))              # zero halo at +1

    def shifted(di, dj):
        return xp[:, di:di + H, dj:dj + W, :].reshape(Mrows, Cin)

    x4 = jnp.concatenate([shifted(0, 0), shifted(0, 1), shifted(1, 0), shifted(1, 1)],
                         axis=-1)                                    # (Mrows, 4*Cin)
    x4 = jnp.pad(x4, ((0, M_pad - Mrows), (0, 0)))    # zero rows: no effect on stats

    # --- glue: block RHS (4*Cin, 4*Cp).  Output-pixel parities of
    # ConvTranspose2d(k=3, s=2, p=1, output_padding=1):
    #   y[2i  ,2j  ] = x00*w11
    #   y[2i  ,2j+1] = x00*w12 + x01*w10
    #   y[2i+1,2j  ] = x00*w21 + x10*w01
    #   y[2i+1,2j+1] = x00*w22 + x01*w20 + x10*w02 + x11*w00
    wf = weight.astype(jnp.float32)

    def tap(ky, kx):
        return jnp.pad(wf[:, :, ky, kx], ((0, 0), (0, Cp - Cout)))  # (Cin, Cp)

    Z = jnp.zeros((Cin, Cp), jnp.float32)
    wblock = jnp.concatenate([
        jnp.concatenate([tap(1, 1), tap(1, 2), tap(2, 1), tap(2, 2)], axis=-1),  # x00
        jnp.concatenate([Z,         tap(1, 0), Z,         tap(2, 0)], axis=-1),  # x01
        jnp.concatenate([Z,         Z,         tap(0, 1), tap(0, 2)], axis=-1),  # x10
        jnp.concatenate([Z,         Z,         Z,         tap(0, 0)], axis=-1),  # x11
    ], axis=0).astype(jnp.bfloat16)                                   # (4*Cin, 4*Cp)

    row_map = lambda g, i: (g * Mt + i, 0)

    flops1 = 2 * M_pad * (4 * Cin) * L
    bytes1 = M_pad * 4 * Cin * 2 + 4 * Cin * L * 2 + M_pad * L * 2 + G * 16 * L * 4

    conv_out, stats = pl.pallas_call(
        _conv_stats_kernel,
        out_shape=(
            jax.ShapeDtypeStruct((M_pad, L), jnp.bfloat16),          # bf16 intermediate
            jax.ShapeDtypeStruct((G * 16, L), jnp.float32),          # per-group sum / sumsq
        ),
        grid_spec=pltpu.PrefetchScalarGridSpec(
            num_scalar_prefetch=0,
            grid=(G, Mt),
            in_specs=[
                pl.BlockSpec((tm, 4 * Cin), row_map),
                pl.BlockSpec((4 * Cin, L), lambda g, i: (0, 0)),
            ],
            out_specs=[
                pl.BlockSpec((tm, L), row_map),
                pl.BlockSpec((16, L), lambda g, i: (g, 0)),
            ],
        ),
        compiler_params=pltpu.CompilerParams(
            dimension_semantics=("parallel", "arbitrary"),
            vmem_limit_bytes=vmem_limit,
        ),
        cost_estimate=pl.CostEstimate(flops=flops1, transcendentals=0,
                                      bytes_accessed=bytes1),
    )(x4, wblock)

    # --- tiny JAX: fold partial stats -> per-channel scale/shift ---
    stats = stats.reshape(G, 16, L)
    sum_c = stats[:, 0:8, :].sum(axis=(0, 1)).reshape(4, Cp).sum(axis=0)
    ssq_c = stats[:, 8:16, :].sum(axis=(0, 1)).reshape(4, Cp).sum(axis=0)
    cnt = jnp.float32(4 * Mrows)                        # N * (2H) * (2W) per channel
    mean = sum_c / cnt
    var = jnp.maximum(ssq_c / cnt - mean * mean, 0.0)   # biased var (PyTorch BN train)
    gamma_p = jnp.pad(gamma.astype(jnp.float32), (0, Cp - Cout))
    beta_p = jnp.pad(beta.astype(jnp.float32), (0, Cp - Cout))
    scale_c = gamma_p * jax.lax.rsqrt(var + jnp.float32(eps))
    shift_c = beta_p - mean * scale_c
    scale = jnp.tile(scale_c, 4).reshape(1, L)
    shift = jnp.tile(shift_c, 4).reshape(1, L)

    # --- Pass 2: lane-dense BN + activation (bf16 in, bf16 out), budget-driven tiles ---
    n1 = M_pad // tm
    per_row2 = 12 * L                   # bf16 in/out double-buffered + f32 temp
    tm2 = tm
    for k in range(n1, 0, -1):
        if n1 % k == 0 and tm * k * per_row2 <= budget:
            tm2 = tm * k
            break

    flops2 = 4 * M_pad * L
    bytes2 = 2 * M_pad * L * 2 + 2 * L * 4
    act = pl.pallas_call(
        functools.partial(_bn_act_kernel, last=last),
        out_shape=jax.ShapeDtypeStruct((M_pad, L), jnp.bfloat16),
        grid_spec=pltpu.PrefetchScalarGridSpec(
            num_scalar_prefetch=0,
            grid=(M_pad // tm2,),
            in_specs=[
                pl.BlockSpec((tm2, L), lambda i: (i, 0)),
                pl.BlockSpec((1, L), lambda i: (0, 0)),
                pl.BlockSpec((1, L), lambda i: (0, 0)),
            ],
            out_specs=pl.BlockSpec((tm2, L), lambda i: (i, 0)),
        ),
        compiler_params=pltpu.CompilerParams(
            dimension_semantics=("parallel",),
            vmem_limit_bytes=vmem_limit,
        ),
        cost_estimate=pl.CostEstimate(
            flops=flops2, transcendentals=(M_pad * L if last else 0),
            bytes_accessed=bytes2),
    )(conv_out, scale, shift)

    # --- epilogue: drop padding, pixel-shuffle the 4 parities back to (N, Cout, 2H, 2W) ---
    # TODO(synk): fuse this pixel-shuffle into pass 2 (channel-major output blocks) to save
    # one read+write pass over the final tensor; left in XLA (reading bf16) for lowering safety.
    act = act[:Mrows].reshape(N, H, W, 2, 2, Cp)[..., :Cout]
    out = jnp.transpose(act, (0, 5, 1, 3, 2, 4)).reshape(N, Cout, 2 * H, 2 * W)
    return out.astype(jnp.float32)


# ---------------------------------------------------------------------------
# Pure-JAX reference (dilate + pad + conv with flipped kernel), for validation
# ---------------------------------------------------------------------------
def _reference(x, weight, gamma, beta, *, last=False, eps=1e-5):
    N, Cin, H, W = x.shape
    x = x.astype(jnp.float32)
    z = jnp.zeros((N, Cin, 2 * H + 2, 2 * W + 2), jnp.float32)
    z = z.at[:, :, 1:2 * H:2, 1:2 * W:2].set(x)
    wf = jnp.transpose(weight[:, :, ::-1, ::-1], (1, 0, 2, 3)).astype(jnp.float32)
    y = jax.lax.conv_general_dilated(
        z, wf, (1, 1), "VALID",
        dimension_numbers=("NCHW", "OIHW", "NCHW"),
        precision=jax.lax.Precision.HIGHEST)
    mean = jnp.mean(y, axis=(0, 2, 3), keepdims=True)
    var = jnp.var(y, axis=(0, 2, 3), keepdims=True)
    yn = (y - mean) * jax.lax.rsqrt(var + jnp.float32(eps))
    yn = yn * gamma.reshape(1, -1, 1, 1) + beta.reshape(1, -1, 1, 1)
    return jnp.tanh(yn) if last else jnp.where(yn > 0, yn, 0.01 * yn)


if __name__ == "__main__":
    key = jax.random.PRNGKey(0)
    k1, k2, k3, k4, k5 = jax.random.split(key, 5)

    # small shapes consistent with the module (spatial doubles, Cin -> Cout)
    N, Cin, H, W, Cout = 2, 4, 16, 16, 8
    x = jax.random.normal(k1, (N, Cin, H, W), jnp.float32)
    weight = jax.random.normal(k2, (Cin, Cout, 3, 3), jnp.float32) / jnp.sqrt(Cin * 9.0)
    bias = 0.1 * jax.random.normal(k3, (Cout,), jnp.float32)
    gamma = 1.0 + 0.1 * jax.random.normal(k4, (Cout,), jnp.float32)
    beta = 0.1 * jax.random.normal(k5, (Cout,), jnp.float32)

    fwd = jax.jit(functools.partial(deconv_block, last=False))
    y = fwd(x, weight, bias, gamma, beta)
    jax.block_until_ready(y)

    assert y.shape == (N, Cout, 2 * H, 2 * W)
    assert bool(jnp.all(jnp.isfinite(y)))

    y_ref = _reference(x, weight, gamma, beta, last=False)
    max_err = float(jnp.max(jnp.abs(y - y_ref)))
    assert bool(jnp.allclose(y, y_ref, rtol=5e-2, atol=5e-2)), max_err

    # also exercise the `last=True` (Tanh) branch
    fwd_t = jax.jit(functools.partial(deconv_block, last=True))
    yt = fwd_t(x, weight, bias, gamma, beta)
    jax.block_until_ready(yt)
    yt_ref = _reference(x, weight, gamma, beta, last=True)
    max_err_t = float(jnp.max(jnp.abs(yt - yt_ref)))
    assert bool(jnp.allclose(yt, yt_ref, rtol=5e-2, atol=5e-2)), max_err_t

    print("KERNEL_OK")
</pallas_src>

<mosaic_0001>
module attributes {stable_mosaic.version = 11 : i64} {
  func.func @_conv_stats_kernel(%arg0: i32, %arg1: i32, %arg2: memref<256x16xbf16, #tpu.memory_space<vmem>>, %arg3: memref<16x128xbf16, #tpu.memory_space<vmem>>, %arg4: memref<256x128xbf16, #tpu.memory_space<vmem>>, %arg5: memref<16x128xf32, #tpu.memory_space<vmem>>) attributes {dimension_semantics = [#tpu.dimension_semantics<parallel>, #tpu.dimension_semantics<arbitrary>], iteration_bounds = array<i64: 2, 1>, scalar_prefetch = 0 : i64, scratch_operands = 0 : i64, tpu.core_type = #tpu.core_type<tc>, window_params = [{transform_indices = @transform_0, window_bounds = array<i64: 256, 16>}, {pipeline_mode = #tpu.pipeline_mode<synchronous>, transform_indices = @transform_1, window_bounds = array<i64: 16, 128>}, {transform_indices = @transform_2, window_bounds = array<i64: 256, 128>}, {transform_indices = @transform_3, window_bounds = array<i64: 16, 128>}]} {
    %c0_i32 = arith.constant 0 : i32
    %0 = arith.cmpi eq, %arg1, %c0_i32 : i32
    %1 = arith.extui %0 : i1 to i32
    %c0_i32_0 = arith.constant 0 : i32
    %2 = arith.cmpi ne, %1, %c0_i32_0 : i32
    scf.if %2 {
      %cst_15 = arith.constant 0.000000e+00 : f32
      %18 = vector.broadcast %cst_15 : f32 to vector<16x128xf32>
      %c0_16 = arith.constant 0 : index
      %c0_17 = arith.constant 0 : index
      %19 = vector.load %arg5[%c0_16, %c0_17] : memref<16x128xf32, #tpu.memory_space<vmem>>, vector<16x128xf32>
      tpu.vector_store %arg5[%c0_16, %c0_17], %18 {strides = array<i32>} : memref<16x128xf32, #tpu.memory_space<vmem>>, vector<16x128xf32>,
    } else {
    }
    %c0 = arith.constant 0 : index
    %c0_1 = arith.constant 0 : index
    %3 = vector.load %arg2[%c0, %c0_1] : memref<256x16xbf16, #tpu.memory_space<vmem>>, vector<256x16xbf16>
    %c0_2 = arith.constant 0 : index
    %c0_3 = arith.constant 0 : index
    %4 = vector.load %arg3[%c0_2, %c0_3] : memref<16x128xbf16, #tpu.memory_space<vmem>>, vector<16x128xbf16>
    %cst = arith.constant dense<0.000000e+00> : vector<256x128xf32>
    %5 = tpu.matmul %3, %4, %cst {dimension_numbers = #tpu.dot_dimension_numbers<[1], [0], [0], [1], [0, 0, 1, 1], [], []>} : vector<256x16xbf16>, vector<16x128xbf16>, vector<256x128xf32> -> vector<256x128xf32>
    %6 = arith.truncf %5 : vector<256x128xf32> to vector<256x128xbf16>
    %c0_4 = arith.constant 0 : index
    %c0_5 = arith.constant 0 : index
    %7 = vector.load %arg4[%c0_4, %c0_5] : memref<256x128xbf16, #tpu.memory_space<vmem>>, vector<256x128xbf16>
    tpu.vector_store %arg4[%c0_4, %c0_5], %6 {strides = array<i32>} : memref<256x128xbf16, #tpu.memory_space<vmem>>, vector<256x128xbf16>,
    %8 = vector.shape_cast %5 : vector<256x128xf32> to vector<32x8x128xf32>
    %c0_6 = arith.constant 0 : index
    %c0_7 = arith.constant 0 : index
    %9 = vector.load %arg5[%c0_6, %c0_7] : memref<16x128xf32, #tpu.memory_space<vmem>>, vector<8x128xf32>
    %cst_8 = arith.constant dense<0.000000e+00> : vector<8x128xf32>
    %10 = vector.multi_reduction <add>, %8, %cst_8 [0] : vector<32x8x128xf32> to vector<8x128xf32>
    %11 = arith.addf %9, %10 : vector<8x128xf32>
    %c0_9 = arith.constant 0 : index
    %c0_10 = arith.constant 0 : index
    %12 = vector.load %arg5[%c0_9, %c0_10] : memref<16x128xf32, #tpu.memory_space<vmem>>, vector<8x128xf32>
    tpu.vector_store %arg5[%c0_9, %c0_10], %11 {strides = array<i32>} : memref<16x128xf32, #tpu.memory_space<vmem>>, vector<8x128xf32>,
    %c8 = arith.constant 8 : index
    %c0_11 = arith.constant 0 : index
    %13 = vector.load %arg5[%c8, %c0_11] : memref<16x128xf32, #tpu.memory_space<vmem>>, vector<8x128xf32>
    %14 = arith.mulf %8, %8 : vector<32x8x128xf32>
    %cst_12 = arith.constant dense<0.000000e+00> : vector<8x128xf32>
    %15 = vector.multi_reduction <add>, %14, %cst_12 [0] : vector<32x8x128xf32> to vector<8x128xf32>
    %16 = arith.addf %13, %15 : vector<8x128xf32>
    %c8_13 = arith.constant 8 : index
    %c0_14 = arith.constant 0 : index
    %17 = vector.load %arg5[%c8_13, %c0_14] : memref<16x128xf32, #tpu.memory_space<vmem>>, vector<8x128xf32>
    tpu.vector_store %arg5[%c8_13, %c0_14], %16 {strides = array<i32>} : memref<16x128xf32, #tpu.memory_space<vmem>>, vector<8x128xf32>,
    return
  }
  func.func @transform_0(%arg0: i32, %arg1: i32) -> (i32, i32) {
    %c1_i32 = arith.constant 1 : i32
    %0 = arith.muli %arg0, %c1_i32 : i32
    %1 = arith.addi %0, %arg1 : i32
    %c0_i32 = arith.constant 0 : i32
    %c0_i32_0 = arith.constant 0 : i32
    return %1, %c0_i32 : i32, i32
  }
  func.func @transform_1(%arg0: i32, %arg1: i32) -> (i32, i32) {
    %c0_i32 = arith.constant 0 : i32
    %c0_i32_0 = arith.constant 0 : i32
    %c0_i32_1 = arith.constant 0 : i32
    return %c0_i32, %c0_i32_0 : i32, i32
  }
  func.func @transform_2(%arg0: i32, %arg1: i32) -> (i32, i32) {
    %c1_i32 = arith.constant 1 : i32
    %0 = arith.muli %arg0, %c1_i32 : i32
    %1 = arith.addi %0, %arg1 : i32
    %c0_i32 = arith.constant 0 : i32
    %c0_i32_0 = arith.constant 0 : i32
    return %1, %c0_i32 : i32, i32
  }
  func.func @transform_3(%arg0: i32, %arg1: i32) -> (i32, i32) {
    %c0_i32 = arith.constant 0 : i32
    %c0_i32_0 = arith.constant 0 : i32
    return %arg0, %c0_i32 : i32, i32
  }
}

module attributes {stable_mosaic.version = 11 : i64} {
  func.func @_bn_act_kernel(%arg0: i32, %arg1: memref<512x128xbf16, #tpu.memory_space<vmem>>, %arg2: memref<1x128xf32, #tpu.memory_space<vmem>>, %arg3: memref<1x128xf32, #tpu.memory_space<vmem>>, %arg4: memref<512x128xbf16, #tpu.memory_space<vmem>>) attributes {dimension_semantics = [#tpu.dimension_semantics<parallel>], iteration_bounds = array<i64: 1>, scalar_prefetch = 0 : i64, scratch_operands = 0 : i64, tpu.core_type = #tpu.core_type<tc>, window_params = [{transform_indices = @transform_0, window_bounds = array<i64: 512, 128>}, {pipeline_mode = #tpu.pipeline_mode<synchronous>, transform_indices = @transform_1, window_bounds = array<i64: 1, 128>}, {pipeline_mode = #tpu.pipeline_mode<synchronous>, transform_indices = @transform_2, window_bounds = array<i64: 1, 128>}, {transform_indices = @transform_3, window_bounds = array<i64: 512, 128>}]} {
    %c0 = arith.constant 0 : index
    %c0_0 = arith.constant 0 : index
    %0 = vector.load %arg1[%c0, %c0_0] : memref<512x128xbf16, #tpu.memory_space<vmem>>, vector<512x128xbf16>
    %1 = arith.extf %0 : vector<512x128xbf16> to vector<512x128xf32>
    %c0_1 = arith.constant 0 : index
    %c0_2 = arith.constant 0 : index
    %2 = vector.load %arg2[%c0_1, %c0_2] : memref<1x128xf32, #tpu.memory_space<vmem>>, vector<1x128xf32>
    %3 = vector.broadcast %2 : vector<1x128xf32> to vector<512x128xf32>
    %4 = arith.mulf %1, %3 : vector<512x128xf32>
    %c0_3 = arith.constant 0 : index
    %c0_4 = arith.constant 0 : index
    %5 = vector.load %arg3[%c0_3, %c0_4] : memref<1x128xf32, #tpu.memory_space<vmem>>, vector<1x128xf32>
    %6 = vector.broadcast %5 : vector<1x128xf32> to vector<512x128xf32>
    %7 = arith.addf %4, %6 : vector<512x128xf32>
    %cst = arith.constant 0.000000e+00 : f32
    %8 = vector.broadcast %cst : f32 to vector<512x128xf32>
    %9 = arith.cmpf ogt, %7, %8 : vector<512x128xf32>
    %cst_5 = arith.constant 0.00999999977 : f32
    %10 = vector.broadcast %cst_5 : f32 to vector<512x128xf32>
    %11 = arith.mulf %10, %7 : vector<512x128xf32>
    %12 = arith.select %9, %7, %11 : vector<512x128xi1>, vector<512x128xf32>
    %13 = arith.truncf %12 : vector<512x128xf32> to vector<512x128xbf16>
    %c0_6 = arith.constant 0 : index
    %c0_7 = arith.constant 0 : index
    %14 = vector.load %arg4[%c0_6, %c0_7] : memref<512x128xbf16, #tpu.memory_space<vmem>>, vector<512x128xbf16>
    tpu.vector_store %arg4[%c0_6, %c0_7], %13 {strides = array<i32>} : memref<512x128xbf16, #tpu.memory_space<vmem>>, vector<512x128xbf16>,
    return
  }
  func.func @transform_0(%arg0: i32) -> (i32, i32) {
    %c0_i32 = arith.constant 0 : i32
    %c0_i32_0 = arith.constant 0 : i32
    return %arg0, %c0_i32 : i32, i32
  }
  func.func @transform_1(%arg0: i32) -> (i32, i32) {
    %c0_i32 = arith.constant 0 : i32
    %c0_i32_0 = arith.constant 0 : i32
    %c0_i32_1 = arith.constant 0 : i32
    return %c0_i32, %c0_i32_0 : i32, i32
  }
  func.func @transform_2(%arg0: i32) -> (i32, i32) {
    %c0_i32 = arith.constant 0 : i32
    %c0_i32_0 = arith.constant 0 : i32
    %c0_i32_1 = arith.constant 0 : i32
    return %c0_i32, %c0_i32_0 : i32, i32
  }
  func.func @transform_3(%arg0: i32) -> (i32, i32) {
    %c0_i32 = arith.constant 0 : i32
    %c0_i32_0 = arith.constant 0 : i32
    return %arg0, %c0_i32 : i32, i32
  }
}

</mosaic_0001>

<llo_original>
// kernel: tile.18
$region0: #{tile.18}
  #allocation0 [shape = 's32[1]{0}', space=sflag, size = 0x4, scoped, tag = 'scoped memory for tile.18']
  %s0 = inlined_call_operand.vmem [shape: f32[32], index: 0, kind: input, shape index: {}]
  %s1 = inlined_call_operand.vmem [shape: f32[4,32], index: 1, kind: output, shape index: {}]
  // Predicated region
  $region2: #{tile.18} parent=0 // pred_check
    _
  $region3: #{tile.18} parent=0 // pred_check_branch
    %3 = sbr.rel (0) target = $region5
  $region4: #{tile.18} parent=0 // pred_region
    _
  $region5: #{tile.18} parent=0 // pred_fallthru
    _
  %v4 = vld [vmem:[%s0] ss:$0 sm:$0xff]
  %5 = vst [vmem:[%s1] sm:$0xf] %v4

// kernel: tile.19
$region0: #{tile.19}
  %s0 = inlined_call_operand.vmem [shape: f32[4,32], index: 0, kind: input, shape index: {}]
  %s1 = inlined_call_operand.vmem [shape: f32[1,128], index: 1, kind: output, shape index: {}]
  $region1: #{tile.19} parent=0
    #allocation0 [shape = 'u8[4096]{0}', space=vmem, size = 0x1000, scoped, tag = 'scoped mem for output reshape']
    #allocation1 [shape = 'u8[4096]{0}', space=vmem, size = 0x1000, scoped, tag = 'scoped mem for input reshape']
    %s3 = sshllo.u32 0, 4
    %v4 = vld [vmem:[%s0] sm:%s3]
    %5 = vst [vmem:[#allocation1] sm:%s3] %v4
    %v6 = vld [vmem:[#allocation1] sm:$0x1]
    %vm7 = vcmask 261120
    %8 = vst.msk [vmem:[#allocation0] sm:$0x1] %vm7, %v6
    %s9 = scalar_lea.vmem [#allocation1], 3
    %v10 = vld [vmem:[%s9] sm:$0x1]
    %11 = vrot.lane.b32.xlu0 %v10, 96
    %v12 = vpop.permute.xlu0 %11
    %vm13 = vcmask 1048320
    %14 = vst.msk [vmem:[#allocation0] sm:$0x1] %vm13, %v12
    %s15 = scalar_lea.vmem [#allocation1], 2
    %v16 = vld [vmem:[%s15] sm:$0x1]
    %17 = vrot.lane.b32.xlu0 %v16, 64
    %v18 = vpop.permute.xlu0 %17
    %vm19 = vcmask 785920
    %20 = vst.msk [vmem:[#allocation0] sm:$0x1] %vm19, %v18
    %s21 = scalar_lea.vmem [#allocation1], 1
    %v22 = vld [vmem:[%s21] sm:$0x1]
    %23 = vrot.lane.b32.xlu0 %v22, 32
    %v24 = vpop.permute.xlu0 %23
    %vm25 = vcmask 523520
    %26 = vst.msk [vmem:[#allocation0] sm:$0x1] %vm25, %v24
    %s28 = sshllo.u32 0, 1
    %v30 = vld [vmem:[#allocation0] sm:%s28]
    %s31 = sshllo.u32 0, 1
    %32 = vst [vmem:[%s1] sm:%s31] %v30

// kernel: deconv_block.3
$region0: #{deconv_block.3}
  #allocation0 [shape = 'u32[]', space=smem, size = 0x4, offset = 0x4, fixed_abs, tag = 'smem constant byte address 0x4 - core index']
  #allocation1 [shape = 'u32[144,128]{1,0:T(1,128)}', space=vmem, size = 0x12000, scoped, tag = 'internal scratch']
  %s0 = inlined_call_operand.vmem [shape: bf16[512,128], index: 0, kind: input, shape index: {}]
  %s1 = inlined_call_operand.vmem [shape: f32[1,128], index: 1, kind: input, shape index: {}]
  %s2 = inlined_call_operand.vmem [shape: f32[1,128], index: 2, kind: input, shape index: {}]
  %s3 = inlined_call_operand.vmem [shape: bf16[512,128], index: 3, kind: output, shape index: {}]
  %s4 = sld [smem:[#allocation0]]
  $region22: #{deconv_block.3} parent=0
    _
  %s6 = ssub.s32 1, %s4
  %s7 = scalar_select 0, %s6, %s4
  // Predicated region
  $region2: #{deconv_block.3} parent=0 // pred_check
    _
  $region3: #{deconv_block.3} parent=0 // pred_check_branch
    %9 = sbr.rel (0) target = $region5
  $region4: #{deconv_block.3} parent=0 // pred_region
    _
  $region5: #{deconv_block.3} parent=0 // pred_fallthru
    _
  // Predicated region
  $region6: #{deconv_block.3} parent=0 // pred_check
    _
  $region7: #{deconv_block.3} parent=0 // pred_check_branch
    %11 = sbr.rel (0) target = $region9
  $region8: #{deconv_block.3} parent=0 // pred_region
    _
  $region9: #{deconv_block.3} parent=0 // pred_fallthru
    _
  // Predicated region
  $region10: #{deconv_block.3} parent=0 // pred_check
    _
  $region11: #{deconv_block.3} parent=0 // pred_check_branch
    %13 = sbr.rel (0) target = $region13
  $region12: #{deconv_block.3} parent=0 // pred_region
    _
  $region13: #{deconv_block.3} parent=0 // pred_fallthru
    _
  %v14 = vld [vmem:[%s0] sm:$0xf]
  %v15 = vld [vmem:[%s0 + $0x4] sm:$0xf]
  %v16 = vld [vmem:[%s0 + $0x8] sm:$0xf]
  %v17 = vld [vmem:[%s0 + $0xc] sm:$0xf]
  %v18 = vld [vmem:[%s0 + $0x10] sm:$0xf]
  %v19 = vld [vmem:[%s0 + $0x14] sm:$0xf]
  %v20 = vld [vmem:[%s0 + $0x18] sm:$0xf]
  %v21 = vld [vmem:[%s0 + $0x1c] sm:$0xf]
  %v22 = vld [vmem:[%s0 + $0x20] sm:$0xf]
  %v23 = vld [vmem:[%s0 + $0x24] sm:$0xf]
  %v24 = vld [vmem:[%s0 + $0x28] sm:$0xf]
  %v25 = vld [vmem:[%s0 + $0x2c] sm:$0xf]
  %v26 = vld [vmem:[%s0 + $0x30] sm:$0xf]
  %v27 = vld [vmem:[%s0 + $0x34] sm:$0xf]
  %v28 = vld [vmem:[%s0 + $0x38] sm:$0xf]
  %v29 = vld [vmem:[%s0 + $0x3c] sm:$0xf]
  %v30 = vld [vmem:[%s0 + $0x40] sm:$0xf]
  %v31 = vld [vmem:[%s0 + $0x44] sm:$0xf]
  %v32 = vld [vmem:[%s0 + $0x48] sm:$0xf]
  %v33 = vld [vmem:[%s0 + $0x4c] sm:$0xf]
  %v34 = vld [vmem:[%s0 + $0x50] sm:$0xf]
  %v35 = vld [vmem:[%s0 + $0x54] sm:$0xf]
  %v36 = vld [vmem:[%s0 + $0x58] sm:$0xf]
  %v37 = vld [vmem:[%s0 + $0x5c] sm:$0xf]
  %v38 = vld [vmem:[%s0 + $0x60] sm:$0xf]
  %v39 = vld [vmem:[%s0 + $0x64] sm:$0xf]
  %v40 = vld [vmem:[%s0 + $0x68] sm:$0xf]
  %v41 = vld [vmem:[%s0 + $0x6c] sm:$0xf]
  %v42 = vld [vmem:[%s0 + $0x70] sm:$0xf]
  %v43 = vld [vmem:[%s0 + $0x74] sm:$0xf]
  %v44 = vld [vmem:[%s0 + $0x78] sm:$0xf]
  %v45 = vld [vmem:[%s0 + $0x7c] sm:$0xf]
  %v46 = vld [vmem:[%s0 + $0x80] sm:$0xf]
  %v47 = vld [vmem:[%s0 + $0x84] sm:$0xf]
  %v48 = vld [vmem:[%s0 + $0x88] sm:$0xf]
  %v49 = vld [vmem:[%s0 + $0x8c] sm:$0xf]
  %v50 = vld [vmem:[%s0 + $0x90] sm:$0xf]
  %v51 = vld [vmem:[%s0 + $0x94] sm:$0xf]
  %v52 = vld [vmem:[%s0 + $0x98] sm:$0xf]
  %v53 = vld [vmem:[%s0 + $0x9c] sm:$0xf]
  %v54 = vld [vmem:[%s0 + $0xa0] sm:$0xf]
  %v55 = vld [vmem:[%s0 + $0xa4] sm:$0xf]
  %v56 = vld [vmem:[%s0 + $0xa8] sm:$0xf]
  %v57 = vld [vmem:[%s0 + $0xac] sm:$0xf]
  %v58 = vld [vmem:[%s0 + $0xb0] sm:$0xf]
  %v59 = vld [vmem:[%s0 + $0xb4] sm:$0xf]
  %v60 = vld [vmem:[%s0 + $0xb8] sm:$0xf]
  %v61 = vld [vmem:[%s0 + $0xbc] sm:$0xf]
  %v62 = vld [vmem:[%s0 + $0xc0] sm:$0xf]
  %v63 = vld [vmem:[%s0 + $0xc4] sm:$0xf]
  %v64 = vld [vmem:[%s0 + $0xc8] sm:$0xf]
  %v65 = vld [vmem:[%s0 + $0xcc] sm:$0xf]
  %v66 = vld [vmem:[%s0 + $0xd0] sm:$0xf]
  %v67 = vld [vmem:[%s0 + $0xd4] sm:$0xf]
  %v68 = vld [vmem:[%s0 + $0xd8] sm:$0xf]
  %v69 = vld [vmem:[%s0 + $0xdc] sm:$0xf]
  %v70 = vld [vmem:[%s0 + $0xe0] sm:$0xf]
  %v71 = vld [vmem:[%s0 + $0xe4] sm:$0xf]
  %v72 = vld [vmem:[%s0 + $0xe8] sm:$0xf]
  %v73 = vld [vmem:[%s0 + $0xec] sm:$0xf]
  %v74 = vld [vmem:[%s0 + $0xf0] sm:$0xf]
  %v75 = vld [vmem:[%s0 + $0xf4] sm:$0xf]
  %v76 = vld [vmem:[%s0 + $0xf8] sm:$0xf]
  %v77 = vld [vmem:[%s0 + $0xfc] sm:$0xf]
  %v78 = vunpack.c.l.bf16 %v14
  %v79 = vunpack.c.l.bf16 %v15
  %v80 = vunpack.c.l.bf16 %v16
  %v81 = vunpack.c.l.bf16 %v17
  %v82 = vunpack.c.l.bf16 %v18
  %v83 = vunpack.c.l.bf16 %v19
  %v84 = vunpack.c.l.bf16 %v20
  %v85 = vunpack.c.l.bf16 %v21
  %v86 = vunpack.c.l.bf16 %v22
  %v87 = vunpack.c.l.bf16 %v23
  %v88 = vunpack.c.l.bf16 %v24
  %v89 = vunpack.c.l.bf16 %v25
  %v90 = vunpack.c.l.bf16 %v26
  %v91 = vunpack.c.l.bf16 %v27
  %v92 = vunpack.c.l.bf16 %v28
  %v93 = vunpack.c.l.bf16 %v29
  %v94 = vunpack.c.l.bf16 %v30
  %v95 = vunpack.c.l.bf16 %v31
  %v96 = vunpack.c.l.bf16 %v32
  %v97 = vunpack.c.l.bf16 %v33
  %v98 = vunpack.c.l.bf16 %v34
  %v99 = vunpack.c.l.bf16 %v35
  %v100 = vunpack.c.l.bf16 %v36
  %v101 = vunpack.c.l.bf16 %v37
  %v102 = vunpack.c.l.bf16 %v38
  %v103 = vunpack.c.l.bf16 %v39
  %v104 = vunpack.c.l.bf16 %v40
  %v105 = vunpack.c.l.bf16 %v41
  %v106 = vunpack.c.l.bf16 %v42
  %v107 = vunpack.c.l.bf16 %v43
  %v108 = vunpack.c.l.bf16 %v44
  %v109 = vunpack.c.l.bf16 %v45
  %v110 = vunpack.c.l.bf16 %v46
  %v111 = vunpack.c.l.bf16 %v47
  %v112 = vunpack.c.l.bf16 %v48
  %v113 = vunpack.c.l.bf16 %v49
  %v114 = vunpack.c.l.bf16 %v50
  %v115 = vunpack.c.l.bf16 %v51
  %v116 = vunpack.c.l.bf16 %v52
  %v117 = vunpack.c.l.bf16 %v53
  %v118 = vunpack.c.l.bf16 %v54
  %v119 = vunpack.c.l.bf16 %v55
  %v120 = vunpack.c.l.bf16 %v56
  %v121 = vunpack.c.l.bf16 %v57
  %v122 = vunpack.c.l.bf16 %v58
  %v123 = vunpack.c.l.bf16 %v59
  %v124 = vunpack.c.l.bf16 %v60
  %v125 = vunpack.c.l.bf16 %v61
  %v126 = vunpack.c.l.bf16 %v62
  %v127 = vunpack.c.l.bf16 %v63
  %v128 = vunpack.c.l.bf16 %v64
  %v129 = vunpack.c.l.bf16 %v65
  %v130 = vunpack.c.l.bf16 %v66
  %v131 = vunpack.c.l.bf16 %v67
  %v132 = vunpack.c.l.bf16 %v68
  %v133 = vunpack.c.l.bf16 %v69
  %v134 = vunpack.c.l.bf16 %v70
  %v135 = vunpack.c.l.bf16 %v71
  %v136 = vunpack.c.l.bf16 %v72
  %v137 = vunpack.c.l.bf16 %v73
  %v138 = vunpack.c.l.bf16 %v74
  %v139 = vunpack.c.l.bf16 %v75
  %v140 = vunpack.c.l.bf16 %v76
  %v141 = vunpack.c.l.bf16 %v77
  %v142 = vld [vmem:[%s1] sm:$0x1]
  %v144 = vlaneseq
  %v145 = vshrl.u32 %v144, 7
  %v146 = vsub.s32 0, %v145
  %v147 = vrot.slane %v142, %v146
  %v149 = vmul.f32 %v78, %v147
  %v150 = vmul.f32 %v79, %v147
  %v151 = vmul.f32 %v80, %v147
  %v152 = vmul.f32 %v81, %v147
  %v153 = vmul.f32 %v82, %v147
  %v154 = vmul.f32 %v83, %v147
  %v155 = vmul.f32 %v84, %v147
  %v156 = vmul.f32 %v85, %v147
  %v157 = vmul.f32 %v86, %v147
  %v158 = vmul.f32 %v87, %v147
  %v159 = vmul.f32 %v88, %v147
  %v160 = vmul.f32 %v89, %v147
  %v161 = vmul.f32 %v90, %v147
  %v162 = vmul.f32 %v91, %v147
  %v163 = vmul.f32 %v92, %v147
  %v164 = vmul.f32 %v93, %v147
  %v165 = vmul.f32 %v94, %v147
  %v166 = vmul.f32 %v95, %v147
  %v167 = vmul.f32 %v96, %v147
  %v168 = vmul.f32 %v97, %v147
  %v169 = vmul.f32 %v98, %v147
  %v170 = vmul.f32 %v99, %v147
  %v171 = vmul.f32 %v100, %v147
  %v172 = vmul.f32 %v101, %v147
  %v173 = vmul.f32 %v102, %v147
  %v174 = vmul.f32 %v103, %v147
  %v175 = vmul.f32 %v104, %v147
  %v176 = vmul.f32 %v105, %v147
  %v177 = vmul.f32 %v106, %v147
  %v178 = vmul.f32 %v107, %v147
  %v179 = vmul.f32 %v108, %v147
  %v180 = vmul.f32 %v109, %v147
  %v181 = vmul.f32 %v110, %v147
  %v182 = vmul.f32 %v111, %v147
  %v183 = vmul.f32 %v112, %v147
  %v184 = vmul.f32 %v113, %v147
  %v185 = vmul.f32 %v114, %v147
  %v186 = vmul.f32 %v115, %v147
  %v187 = vmul.f32 %v116, %v147
  %v188 = vmul.f32 %v117, %v147
  %v189 = vmul.f32 %v118, %v147
  %v190 = vmul.f32 %v119, %v147
  %v191 = vmul.f32 %v120, %v147
  %v192 = vmul.f32 %v121, %v147
  %v193 = vmul.f32 %v122, %v147
  %v194 = vmul.f32 %v123, %v147
  %v195 = vmul.f32 %v124, %v147
  %v196 = vmul.f32 %v125, %v147
  %v197 = vmul.f32 %v126, %v147
  %v198 = vmul.f32 %v127, %v147
  %v199 = vmul.f32 %v128, %v147
  %v200 = vmul.f32 %v129, %v147
  %v201 = vmul.f32 %v130, %v147
  %v202 = vmul.f32 %v131, %v147
  %v203 = vmul.f32 %v132, %v147
  %v204 = vmul.f32 %v133, %v147
  %v205 = vmul.f32 %v134, %v147
  %v206 = vmul.f32 %v135, %v147
  %v207 = vmul.f32 %v136, %v147
  %v208 = vmul.f32 %v137, %v147
  %v209 = vmul.f32 %v138, %v147
  %v210 = vmul.f32 %v139, %v147
  %v211 = vmul.f32 %v140, %v147
  %v212 = vmul.f32 %v141, %v147
  %v213 = vld [vmem:[%s2] sm:$0x1]
  %v215 = vlaneseq
  %v216 = vshrl.u32 %v215, 7
  %v217 = vsub.s32 0, %v216
  %v218 = vrot.slane %v213, %v217
  %v220 = vadd.f32 %v149, %v218
  %v221 = vadd.f32 %v150, %v218
  %v222 = vadd.f32 %v151, %v218
  %v223 = vadd.f32 %v152, %v218
  %v224 = vadd.f32 %v153, %v218
  %v225 = vadd.f32 %v154, %v218
  %v226 = vadd.f32 %v155, %v218
  %v227 = vadd.f32 %v156, %v218
  %v228 = vadd.f32 %v157, %v218
  %v229 = vadd.f32 %v158, %v218
  %v230 = vadd.f32 %v159, %v218
  %v231 = vadd.f32 %v160, %v218
  %v232 = vadd.f32 %v161, %v218
  %v233 = vadd.f32 %v162, %v218
  %v234 = vadd.f32 %v163, %v218
  %v235 = vadd.f32 %v164, %v218
  %v236 = vadd.f32 %v165, %v218
  %v237 = vadd.f32 %v166, %v218
  %v238 = vadd.f32 %v167, %v218
  %v239 = vadd.f32 %v168, %v218
  %v240 = vadd.f32 %v169, %v218
  %v241 = vadd.f32 %v170, %v218
  %v242 = vadd.f32 %v171, %v218
  %v243 = vadd.f32 %v172, %v218
  %v244 = vadd.f32 %v173, %v218
  %v245 = vadd.f32 %v174, %v218
  %v246 = vadd.f32 %v175, %v218
  %v247 = vadd.f32 %v176, %v218
  %v248 = vadd.f32 %v177, %v218
  %v249 = vadd.f32 %v178, %v218
  %v250 = vadd.f32 %v179, %v218
  %v251 = vadd.f32 %v180, %v218
  %v252 = vadd.f32 %v181, %v218
  %v253 = vadd.f32 %v182, %v218
  %v254 = vadd.f32 %v183, %v218
  %v255 = vadd.f32 %v184, %v218
  %v256 = vadd.f32 %v185, %v218
  %v257 = vadd.f32 %v186, %v218
  %v258 = vadd.f32 %v187, %v218
  %v259 = vadd.f32 %v188, %v218
  %v260 = vadd.f32 %v189, %v218
  %v261 = vadd.f32 %v190, %v218
  %v262 = vadd.f32 %v191, %v218
  %v263 = vadd.f32 %v192, %v218
  %v264 = vadd.f32 %v193, %v218
  %v265 = vadd.f32 %v194, %v218
  %v266 = vadd.f32 %v195, %v218
  %v267 = vadd.f32 %v196, %v218
  %v268 = vadd.f32 %v197, %v218
  %v269 = vadd.f32 %v198, %v218
  %v270 = vadd.f32 %v199, %v218
  %v271 = vadd.f32 %v200, %v218
  %v272 = vadd.f32 %v201, %v218
  %v273 = vadd.f32 %v202, %v218
  %v274 = vadd.f32 %v203, %v218
  %v275 = vadd.f32 %v204, %v218
  %v276 = vadd.f32 %v205, %v218
  %v277 = vadd.f32 %v206, %v218
  %v278 = vadd.f32 %v207, %v218
  %v279 = vadd.f32 %v208, %v218
  %v280 = vadd.f32 %v209, %v218
  %v281 = vadd.f32 %v210, %v218
  %v282 = vadd.f32 %v211, %v218
  %v283 = vadd.f32 %v212, %v218
  %vm284 = vcmp.gt.f32.partialorder %v220, 0.0
  %vm285 = vcmp.gt.f32.partialorder %v221, 0.0
  %vm286 = vcmp.gt.f32.partialorder %v222, 0.0
  %vm287 = vcmp.gt.f32.partialorder %v223, 0.0
  %vm288 = vcmp.gt.f32.partialorder %v224, 0.0
  %vm289 = vcmp.gt.f32.partialorder %v225, 0.0
  %vm290 = vcmp.gt.f32.partialorder %v226, 0.0
  %vm291 = vcmp.gt.f32.partialorder %v227, 0.0
  %vm292 = vcmp.gt.f32.partialorder %v228, 0.0
  %vm293 = vcmp.gt.f32.partialorder %v229, 0.0
  %vm294 = vcmp.gt.f32.partialorder %v230, 0.0
  %vm295 = vcmp.gt.f32.partialorder %v231, 0.0
  %vm296 = vcmp.gt.f32.partialorder %v232, 0.0
  %vm297 = vcmp.gt.f32.partialorder %v233, 0.0
  %vm298 = vcmp.gt.f32.partialorder %v234, 0.0
  %vm299 = vcmp.gt.f32.partialorder %v235, 0.0
  %vm300 = vcmp.gt.f32.partialorder %v236, 0.0
  %vm301 = vcmp.gt.f32.partialorder %v237, 0.0
  %vm302 = vcmp.gt.f32.partialorder %v238, 0.0
  %vm303 = vcmp.gt.f32.partialorder %v239, 0.0
  %vm304 = vcmp.gt.f32.partialorder %v240, 0.0
  %vm305 = vcmp.gt.f32.partialorder %v241, 0.0
  %vm306 = vcmp.gt.f32.partialorder %v242, 0.0
  %vm307 = vcmp.gt.f32.partialorder %v243, 0.0
  %vm308 = vcmp.gt.f32.partialorder %v244, 0.0
  %vm309 = vcmp.gt.f32.partialorder %v245, 0.0
  %vm310 = vcmp.gt.f32.partialorder %v246, 0.0
  %vm311 = vcmp.gt.f32.partialorder %v247, 0.0
  %vm312 = vcmp.gt.f32.partialorder %v248, 0.0
  %vm313 = vcmp.gt.f32.partialorder %v249, 0.0
  %vm314 = vcmp.gt.f32.partialorder %v250, 0.0
  %vm315 = vcmp.gt.f32.partialorder %v251, 0.0
  %vm316 = vcmp.gt.f32.partialorder %v252, 0.0
  %vm317 = vcmp.gt.f32.partialorder %v253, 0.0
  %vm318 = vcmp.gt.f32.partialorder %v254, 0.0
  %vm319 = vcmp.gt.f32.partialorder %v255, 0.0
  %vm320 = vcmp.gt.f32.partialorder %v256, 0.0
  %vm321 = vcmp.gt.f32.partialorder %v257, 0.0
  %vm322 = vcmp.gt.f32.partialorder %v258, 0.0
  %vm323 = vcmp.gt.f32.partialorder %v259, 0.0
  %vm324 = vcmp.gt.f32.partialorder %v260, 0.0
  %vm325 = vcmp.gt.f32.partialorder %v261, 0.0
  %vm326 = vcmp.gt.f32.partialorder %v262, 0.0
  %vm327 = vcmp.gt.f32.partialorder %v263, 0.0
  %vm328 = vcmp.gt.f32.partialorder %v264, 0.0
  %vm329 = vcmp.gt.f32.partialorder %v265, 0.0
  %vm330 = vcmp.gt.f32.partialorder %v266, 0.0
  %vm331 = vcmp.gt.f32.partialorder %v267, 0.0
  %vm332 = vcmp.gt.f32.partialorder %v268, 0.0
  %vm333 = vcmp.gt.f32.partialorder %v269, 0.0
  %vm334 = vcmp.gt.f32.partialorder %v270, 0.0
  %vm335 = vcmp.gt.f32.partialorder %v271, 0.0
  %vm336 = vcmp.gt.f32.partialorder %v272, 0.0
  %vm337 = vcmp.gt.f32.partialorder %v273, 0.0
  %vm338 = vcmp.gt.f32.partialorder %v274, 0.0
  %vm339 = vcmp.gt.f32.partialorder %v275, 0.0
  %vm340 = vcmp.gt.f32.partialorder %v276, 0.0
  %vm341 = vcmp.gt.f32.partialorder %v277, 0.0
  %vm342 = vcmp.gt.f32.partialorder %v278, 0.0
  %vm343 = vcmp.gt.f32.partialorder %v279, 0.0
  %vm344 = vcmp.gt.f32.partialorder %v280, 0.0
  %vm345 = vcmp.gt.f32.partialorder %v281, 0.0
  %vm346 = vcmp.gt.f32.partialorder %v282, 0.0
  %vm347 = vcmp.gt.f32.partialorder %v283, 0.0
  %v348 = vmul.f32 %v220, 0.01
  %v349 = vmul.f32 %v221, 0.01
  %v350 = vmul.f32 %v222, 0.01
  %v351 = vmul.f32 %v223, 0.01
  %v352 = vmul.f32 %v224, 0.01
  %v353 = vmul.f32 %v225, 0.01
  %v354 = vmul.f32 %v226, 0.01
  %v355 = vmul.f32 %v227, 0.01
  %v356 = vmul.f32 %v228, 0.01
  %v357 = vmul.f32 %v229, 0.01
  %v358 = vmul.f32 %v230, 0.01
  %v359 = vmul.f32 %v231, 0.01
  %v360 = vmul.f32 %v232, 0.01
  %v361 = vmul.f32 %v233, 0.01
  %v362 = vmul.f32 %v234, 0.01
  %v363 = vmul.f32 %v235, 0.01
  %v364 = vmul.f32 %v236, 0.01
  %v365 = vmul.f32 %v237, 0.01
  %v366 = vmul.f32 %v238, 0.01
  %v367 = vmul.f32 %v239, 0.01
  %v368 = vmul.f32 %v240, 0.01
  %v369 = vmul.f32 %v241, 0.01
  %v370 = vmul.f32 %v242, 0.01
  %v371 = vmul.f32 %v243, 0.01
  %v372 = vmul.f32 %v244, 0.01
  %v373 = vmul.f32 %v245, 0.01
  %v374 = vmul.f32 %v246, 0.01
  %v375 = vmul.f32 %v247, 0.01
  %v376 = vmul.f32 %v248, 0.01
  %v377 = vmul.f32 %v249, 0.01
  %v378 = vmul.f32 %v250, 0.01
  %v379 = vmul.f32 %v251, 0.01
  %v380 = vmul.f32 %v252, 0.01
  %v381 = vmul.f32 %v253, 0.01
  %v382 = vmul.f32 %v254, 0.01
  %v383 = vmul.f32 %v255, 0.01
  %v384 = vmul.f32 %v256, 0.01
  %v385 = vmul.f32 %v257, 0.01
  %v386 = vmul.f32 %v258, 0.01
  %v387 = vmul.f32 %v259, 0.01
  %v388 = vmul.f32 %v260, 0.01
  %v389 = vmul.f32 %v261, 0.01
  %v390 = vmul.f32 %v262, 0.01
  %v391 = vmul.f32 %v263, 0.01
  %v392 = vmul.f32 %v264, 0.01
  %v393 = vmul.f32 %v265, 0.01
  %v394 = vmul.f32 %v266, 0.01
  %v395 = vmul.f32 %v267, 0.01
  %v396 = vmul.f32 %v268, 0.01
  %v397 = vmul.f32 %v269, 0.01
  %v398 = vmul.f32 %v270, 0.01
  %v399 = vmul.f32 %v271, 0.01
  %v400 = vmul.f32 %v272, 0.01
  %v401 = vmul.f32 %v273, 0.01
  %v402 = vmul.f32 %v274, 0.01
  %v403 = vmul.f32 %v275, 0.01
  %v404 = vmul.f32 %v276, 0.01
  %v405 = vmul.f32 %v277, 0.01
  %v406 = vmul.f32 %v278, 0.01
  %v407 = vmul.f32 %v279, 0.01
  %v408 = vmul.f32 %v280, 0.01
  %v409 = vmul.f32 %v281, 0.01
  %v410 = vmul.f32 %v282, 0.01
  %v411 = vmul.f32 %v283, 0.01
  %v412 = vsel %vm284, %v220, %v348
  %v413 = vsel %vm285, %v221, %v349
  %v414 = vsel %vm286, %v222, %v350
  %v415 = vsel %vm287, %v223, %v351
  %v416 = vsel %vm288, %v224, %v352
  %v417 = vsel %vm289, %v225, %v353
  %v418 = vsel %vm290, %v226, %v354
  %v419 = vsel %vm291, %v227, %v355
  %v420 = vsel %vm292, %v228, %v356
  %v421 = vsel %vm293, %v229, %v357
  %v422 = vsel %vm294, %v230, %v358
  %v423 = vsel %vm295, %v231, %v359
  %v424 = vsel %vm296, %v232, %v360
  %v425 = vsel %vm297, %v233, %v361
  %v426 = vsel %vm298, %v234, %v362
  %v427 = vsel %vm299, %v235, %v363
  %v428 = vsel %vm300, %v236, %v364
  %v429 = vsel %vm301, %v237, %v365
  %v430 = vsel %vm302, %v238, %v366
  %v431 = vsel %vm303, %v239, %v367
  %v432 = vsel %vm304, %v240, %v368
  %v433 = vsel %vm305, %v241, %v369
  %v434 = vsel %vm306, %v242, %v370
  %v435 = vsel %vm307, %v243, %v371
  %v436 = vsel %vm308, %v244, %v372
  %v437 = vsel %vm309, %v245, %v373
  %v438 = vsel %vm310, %v246, %v374
  %v439 = vsel %vm311, %v247, %v375
  %v440 = vsel %vm312, %v248, %v376
  %v441 = vsel %vm313, %v249, %v377
  %v442 = vsel %vm314, %v250, %v378
  %v443 = vsel %vm315, %v251, %v379
  %v444 = vsel %vm316, %v252, %v380
  %v445 = vsel %vm317, %v253, %v381
  %v446 = vsel %vm318, %v254, %v382
  %v447 = vsel %vm319, %v255, %v383
  %v448 = vsel %vm320, %v256, %v384
  %v449 = vsel %vm321, %v257, %v385
  %v450 = vsel %vm322, %v258, %v386
  %v451 = vsel %vm323, %v259, %v387
  %v452 = vsel %vm324, %v260, %v388
  %v453 = vsel %vm325, %v261, %v389
  %v454 = vsel %vm326, %v262, %v390
  %v455 = vsel %vm327, %v263, %v391
  %v456 = vsel %vm328, %v264, %v392
  %v457 = vsel %vm329, %v265, %v393
  %v458 = vsel %vm330, %v266, %v394
  %v459 = vsel %vm331, %v267, %v395
  %v460 = vsel %vm332, %v268, %v396
  %v461 = vsel %vm333, %v269, %v397
  %v462 = vsel %vm334, %v270, %v398
  %v463 = vsel %vm335, %v271, %v399
  %v464 = vsel %vm336, %v272, %v400
  %v465 = vsel %vm337, %v273, %v401
  %v466 = vsel %vm338, %v274, %v402
  %v467 = vsel %vm339, %v275, %v403
  %v468 = vsel %vm340, %v276, %v404
  %v469 = vsel %vm341, %v277, %v405
  %v470 = vsel %vm342, %v278, %v406
  %v471 = vsel %vm343, %v279, %v407
  %v472 = vsel %vm344, %v280, %v408
  %v473 = vsel %vm345, %v281, %v409
  %v474 = vsel %vm346, %v282, %v410
  %v475 = vsel %vm347, %v283, %v411
  %v476 = vpack.c.bf16 %v413, %v412
  %v477 = vpack.c.bf16 %v415, %v414
  %v478 = vpack.c.bf16 %v417, %v416
  %v479 = vpack.c.bf16 %v419, %v418
  %v480 = vpack.c.bf16 %v421, %v420
  %v481 = vpack.c.bf16 %v423, %v422
  %v482 = vpack.c.bf16 %v425, %v424
  %v483 = vpack.c.bf16 %v427, %v426
  %v484 = vpack.c.bf16 %v429, %v428
  %v485 = vpack.c.bf16 %v431, %v430
  %v486 = vpack.c.bf16 %v433, %v432
  %v487 = vpack.c.bf16 %v435, %v434
  %v488 = vpack.c.bf16 %v437, %v436
  %v489 = vpack.c.bf16 %v439, %v438
  %v490 = vpack.c.bf16 %v441, %v440
  %v491 = vpack.c.bf16 %v443, %v442
  %v492 = vpack.c.bf16 %v445, %v444
  %v493 = vpack.c.bf16 %v447, %v446
  %v494 = vpack.c.bf16 %v449, %v448
  %v495 = vpack.c.bf16 %v451, %v450
  %v496 = vpack.c.bf16 %v453, %v452
  %v497 = vpack.c.bf16 %v455, %v454
  %v498 = vpack.c.bf16 %v457, %v456
  %v499 = vpack.c.bf16 %v459, %v458
  %v500 = vpack.c.bf16 %v461, %v460
  %v501 = vpack.c.bf16 %v463, %v462
  %v502 = vpack.c.bf16 %v465, %v464
  %v503 = vpack.c.bf16 %v467, %v466
  %v504 = vpack.c.bf16 %v469, %v468
  %v505 = vpack.c.bf16 %v471, %v470
  %v506 = vpack.c.bf16 %v473, %v472
  %v507 = vpack.c.bf16 %v475, %v474
  %v540 = vunpack.c.l.b16 %v476
  %v541 = vunpack.c.h.b16 %v476
  %v542 = vunpack.c.l.b16 %v477
  %v543 = vunpack.c.h.b16 %v477
  %v544 = vunpack.c.l.b16 %v478
  %v545 = vunpack.c.h.b16 %v478
  %v546 = vunpack.c.l.b16 %v479
  %v547 = vunpack.c.h.b16 %v479
  %v548 = vunpack.c.l.b16 %v480
  %v549 = vunpack.c.h.b16 %v480
  %v550 = vunpack.c.l.b16 %v481
  %v551 = vunpack.c.h.b16 %v481
  %v552 = vunpack.c.l.b16 %v482
  %v553 = vunpack.c.h.b16 %v482
  %v554 = vunpack.c.l.b16 %v483
  %v555 = vunpack.c.h.b16 %v483
  %v556 = vunpack.c.l.b16 %v484
  %v557 = vunpack.c.h.b16 %v484
  %v558 = vunpack.c.l.b16 %v485
  %v559 = vunpack.c.h.b16 %v485
  %v560 = vunpack.c.l.b16 %v486
  %v561 = vunpack.c.h.b16 %v486
  %v562 = vunpack.c.l.b16 %v487
  %v563 = vunpack.c.h.b16 %v487
  %v564 = vunpack.c.l.b16 %v488
  %v565 = vunpack.c.h.b16 %v488
  %v566 = vunpack.c.l.b16 %v489
  %v567 = vunpack.c.h.b16 %v489
  %v568 = vunpack.c.l.b16 %v490
  %v569 = vunpack.c.h.b16 %v490
  %v570 = vunpack.c.l.b16 %v491
  %v571 = vunpack.c.h.b16 %v491
  %v572 = vunpack.c.l.b16 %v492
  %v573 = vunpack.c.h.b16 %v492
  %v574 = vunpack.c.l.b16 %v493
  %v575 = vunpack.c.h.b16 %v493
  %v576 = vunpack.c.l.b16 %v494
  %v577 = vunpack.c.h.b16 %v494
  %v578 = vunpack.c.l.b16 %v495
  %v579 = vunpack.c.h.b16 %v495
  %v580 = vunpack.c.l.b16 %v496
  %v581 = vunpack.c.h.b16 %v496
  %v582 = vunpack.c.l.b16 %v497
  %v583 = vunpack.c.h.b16 %v497
  %v584 = vunpack.c.l.b16 %v498
  %v585 = vunpack.c.h.b16 %v498
  %v586 = vunpack.c.l.b16 %v499
  %v587 = vunpack.c.h.b16 %v499
  %v588 = vunpack.c.l.b16 %v500
  %v589 = vunpack.c.h.b16 %v500
  %v590 = vunpack.c.l.b16 %v501
  %v591 = vunpack.c.h.b16 %v501
  %v592 = vunpack.c.l.b16 %v502
  %v593 = vunpack.c.h.b16 %v502
  %v594 = vunpack.c.l.b16 %v503
  %v595 = vunpack.c.h.b16 %v503
  %v596 = vunpack.c.l.b16 %v504
  %v597 = vunpack.c.h.b16 %v504
  %v598 = vunpack.c.l.b16 %v505
  %v599 = vunpack.c.h.b16 %v505
  %v600 = vunpack.c.l.b16 %v506
  %v601 = vunpack.c.h.b16 %v506
  %v602 = vunpack.c.l.b16 %v507
  %v603 = vunpack.c.h.b16 %v507
  %v604 = vpack.c.b16 %v540, %v540
  %v605 = vpack.c.b16 %v541, %v541
  %v606 = vpack.c.b16 %v542, %v542
  %v607 = vpack.c.b16 %v543, %v543
  %v608 = vpack.c.b16 %v544, %v544
  %v609 = vpack.c.b16 %v545, %v545
  %v610 = vpack.c.b16 %v546, %v546
  %v611 = vpack.c.b16 %v547, %v547
  %v612 = vpack.c.b16 %v548, %v548
  %v613 = vpack.c.b16 %v549, %v549
  %v614 = vpack.c.b16 %v550, %v550
  %v615 = vpack.c.b16 %v551, %v551
  %v616 = vpack.c.b16 %v552, %v552
  %v617 = vpack.c.b16 %v553, %v553
  %v618 = vpack.c.b16 %v554, %v554
  %v619 = vpack.c.b16 %v555, %v555
  %v620 = vpack.c.b16 %v556, %v556
  %v621 = vpack.c.b16 %v557, %v557
  %v622 = vpack.c.b16 %v558, %v558
  %v623 = vpack.c.b16 %v559, %v559
  %v624 = vpack.c.b16 %v560, %v560
  %v625 = vpack.c.b16 %v561, %v561
  %v626 = vpack.c.b16 %v562, %v562
  %v627 = vpack.c.b16 %v563, %v563
  %v628 = vpack.c.b16 %v564, %v564
  %v629 = vpack.c.b16 %v565, %v565
  %v630 = vpack.c.b16 %v566, %v566
  %v631 = vpack.c.b16 %v567, %v567
  %v632 = vpack.c.b16 %v568, %v568
  %v633 = vpack.c.b16 %v569, %v569
  %v634 = vpack.c.b16 %v570, %v570
  %v635 = vpack.c.b16 %v571, %v571
  %v636 = vpack.c.b16 %v572, %v572
  %v637 = vpack.c.b16 %v573, %v573
  %v638 = vpack.c.b16 %v574, %v574
  %v639 = vpack.c.b16 %v575, %v575
  %v640 = vpack.c.b16 %v576, %v576
  %v641 = vpack.c.b16 %v577, %v577
  %v642 = vpack.c.b16 %v578, %v578
  %v643 = vpack.c.b16 %v579, %v579
  %v644 = vpack.c.b16 %v580, %v580
  %v645 = vpack.c.b16 %v581, %v581
  %v646 = vpack.c.b16 %v582, %v582
  %v647 = vpack.c.b16 %v583, %v583
  %v648 = vpack.c.b16 %v584, %v584
  %v649 = vpack.c.b16 %v585, %v585
  %v650 = vpack.c.b16 %v586, %v586
  %v651 = vpack.c.b16 %v587, %v587
  %v652 = vpack.c.b16 %v588, %v588
  %v653 = vpack.c.b16 %v589, %v589
  %v654 = vpack.c.b16 %v590, %v590
  %v655 = vpack.c.b16 %v591, %v591
  %v656 = vpack.c.b16 %v592, %v592
  %v657 = vpack.c.b16 %v593, %v593
  %v658 = vpack.c.b16 %v594, %v594
  %v659 = vpack.c.b16 %v595, %v595
  %v660 = vpack.c.b16 %v596, %v596
  %v661 = vpack.c.b16 %v597, %v597
  %v662 = vpack.c.b16 %v598, %v598
  %v663 = vpack.c.b16 %v599, %v599
  %v664 = vpack.c.b16 %v600, %v600
  %v665 = vpack.c.b16 %v601, %v601
  %v666 = vpack.c.b16 %v602, %v602
  %v667 = vpack.c.b16 %v603, %v603
  %732 = vst [vmem:[%s3] sm:$0xf] %v604
  %733 = vst [vmem:[%s3 + $0x4] sm:$0xf] %v605
  %734 = vst [vmem:[%s3 + $0x8] sm:$0xf] %v606
  %735 = vst [vmem:[%s3 + $0xc] sm:$0xf] %v607
  %736 = vst [vmem:[%s3 + $0x10] sm:$0xf] %v608
  %737 = vst [vmem:[%s3 + $0x14] sm:$0xf] %v609
  %738 = vst [vmem:[%s3 + $0x18] sm:$0xf] %v610
  %739 = vst [vmem:[%s3 + $0x1c] sm:$0xf] %v611
  %740 = vst [vmem:[%s3 + $0x20] sm:$0xf] %v612
  %741 = vst [vmem:[%s3 + $0x24] sm:$0xf] %v613
  %742 = vst [vmem:[%s3 + $0x28] sm:$0xf] %v614
  %743 = vst [vmem:[%s3 + $0x2c] sm:$0xf] %v615
  %744 = vst [vmem:[%s3 + $0x30] sm:$0xf] %v616
  %745 = vst [vmem:[%s3 + $0x34] sm:$0xf] %v617
  %746 = vst [vmem:[%s3 + $0x38] sm:$0xf] %v618
  %747 = vst [vmem:[%s3 + $0x3c] sm:$0xf] %v619
  %748 = vst [vmem:[%s3 + $0x40] sm:$0xf] %v620
  %749 = vst [vmem:[%s3 + $0x44] sm:$0xf] %v621
  %750 = vst [vmem:[%s3 + $0x48] sm:$0xf] %v622
  %751 = vst [vmem:[%s3 + $0x4c] sm:$0xf] %v623
  %752 = vst [vmem:[%s3 + $0x50] sm:$0xf] %v624
  %753 = vst [vmem:[%s3 + $0x54] sm:$0xf] %v625
  %754 = vst [vmem:[%s3 + $0x58] sm:$0xf] %v626
  %755 = vst [vmem:[%s3 + $0x5c] sm:$0xf] %v627
  %756 = vst [vmem:[%s3 + $0x60] sm:$0xf] %v628
  %757 = vst [vmem:[%s3 + $0x64] sm:$0xf] %v629
  %758 = vst [vmem:[%s3 + $0x68] sm:$0xf] %v630
  %759 = vst [vmem:[%s3 + $0x6c] sm:$0xf] %v631
  %760 = vst [vmem:[%s3 + $0x70] sm:$0xf] %v632
  %761 = vst [vmem:[%s3 + $0x74] sm:$0xf] %v633
  %762 = vst [vmem:[%s3 + $0x78] sm:$0xf] %v634
  %763 = vst [vmem:[%s3 + $0x7c] sm:$0xf] %v635
  %764 = vst [vmem:[%s3 + $0x80] sm:$0xf] %v636
  %765 = vst [vmem:[%s3 + $0x84] sm:$0xf] %v637
  %766 = vst [vmem:[%s3 + $0x88] sm:$0xf] %v638
  %767 = vst [vmem:[%s3 + $0x8c] sm:$0xf] %v639
  %768 = vst [vmem:[%s3 + $0x90] sm:$0xf] %v640
  %769 = vst [vmem:[%s3 + $0x94] sm:$0xf] %v641
  %770 = vst [vmem:[%s3 + $0x98] sm:$0xf] %v642
  %771 = vst [vmem:[%s3 + $0x9c] sm:$0xf] %v643
  %772 = vst [vmem:[%s3 + $0xa0] sm:$0xf] %v644
  %773 = vst [vmem:[%s3 + $0xa4] sm:$0xf] %v645
  %774 = vst [vmem:[%s3 + $0xa8] sm:$0xf] %v646
  %775 = vst [vmem:[%s3 + $0xac] sm:$0xf] %v647
  %776 = vst [vmem:[%s3 + $0xb0] sm:$0xf] %v648
  %777 = vst [vmem:[%s3 + $0xb4] sm:$0xf] %v649
  %778 = vst [vmem:[%s3 + $0xb8] sm:$0xf] %v650
  %779 = vst [vmem:[%s3 + $0xbc] sm:$0xf] %v651
  %780 = vst [vmem:[%s3 + $0xc0] sm:$0xf] %v652
  %781 = vst [vmem:[%s3 + $0xc4] sm:$0xf] %v653
  %782 = vst [vmem:[%s3 + $0xc8] sm:$0xf] %v654
  %783 = vst [vmem:[%s3 + $0xcc] sm:$0xf] %v655
  %784 = vst [vmem:[%s3 + $0xd0] sm:$0xf] %v656
  %785 = vst [vmem:[%s3 + $0xd4] sm:$0xf] %v657
  %786 = vst [vmem:[%s3 + $0xd8] sm:$0xf] %v658
  %787 = vst [vmem:[%s3 + $0xdc] sm:$0xf] %v659
  %788 = vst [vmem:[%s3 + $0xe0] sm:$0xf] %v660
  %789 = vst [vmem:[%s3 + $0xe4] sm:$0xf] %v661
  %790 = vst [vmem:[%s3 + $0xe8] sm:$0xf] %v662
  %791 = vst [vmem:[%s3 + $0xec] sm:$0xf] %v663
  %792 = vst [vmem:[%s3 + $0xf0] sm:$0xf] %v664
  %793 = vst [vmem:[%s3 + $0xf4] sm:$0xf] %v665
  %794 = vst [vmem:[%s3 + $0xf8] sm:$0xf] %v666
  %795 = vst [vmem:[%s3 + $0xfc] sm:$0xf] %v667
  // Predicated region
  $region14: #{deconv_block.3} parent=0 // pred_check
    _
  $region15: #{deconv_block.3} parent=0 // pred_check_branch
    %797 = sbr.rel (0) target = $region17
  $region16: #{deconv_block.3} parent=0 // pred_region
    _
  $region17: #{deconv_block.3} parent=0 // pred_fallthru
    _
  // Predicated region
  $region18: #{deconv_block.3} parent=0 // pred_check
    _
  $region19: #{deconv_block.3} parent=0 // pred_check_branch
    %799 = sbr.rel (0) target = $region21
  $region20: #{deconv_block.3} parent=0 // pred_region
    _
  $region21: #{deconv_block.3} parent=0 // pred_fallthru
    _

// kernel: deconv_block.2
$region0: #{deconv_block.2}
  #allocation0 [shape = 'u32[]', space=smem, size = 0x4, offset = 0x4, fixed_abs, tag = 'smem constant byte address 0x4 - core index']
  #allocation1 [shape = 'u32[144,128]{1,0:T(1,128)}', space=vmem, size = 0x12000, scoped, tag = 'internal scratch']
  %s0 = inlined_call_operand.vmem [shape: bf16[512,16], index: 0, kind: input, shape index: {}]
  %s1 = inlined_call_operand.vmem [shape: bf16[16,128], index: 1, kind: input, shape index: {}]
  %s2 = inlined_call_operand.vmem [shape: bf16[512,128], index: 2, kind: output, shape index: {0}]
  %s3 = inlined_call_operand.vmem [shape: f32[32,128], index: 3, kind: output, shape index: {1}]
  %4 = xla_tuple %s2, %s3
  %s5 = sld [smem:[#allocation0]]
  $region53: #{deconv_block.2} parent=0
    _
  %s7 = ssub.s32 1, %s5
  %s8 = scalar_select 0, %s7, %s5
  loop: start=0, step=1, limit=4
  $region2: #{deconv_block.2} parent=0 // loop_pre_header
    _
  $region3: #{deconv_block.2} parent=0 // loop_header
    %s10 = sphi 0, %s14
    %p11 = scmp.ge.s32.totalorder %s10, 4
    %s17 = sphi 0, %s29
    %s18 = sphi 0, %s25
    %s19 = sphi 0, %s17
    %s20 = sphi 0, %s18
    %s21 = sphi 0, %s19
    %s22 = sphi 0, %s20
    %s34 = sphi 0, %s36
    %s37 = sphi 0, %s34
    %s38 = sphi 0, %s37
    %s54 = sphi 0, %s38
    %s58 = sphi 0, %s58
    %s60 = sphi 0, %s58
    %s61 = sphi 0, %s60
    %s75 = sphi 0, %s61
    %s83 = sphi 0, %s85
    %s86 = sphi 0, %s83
    %s87 = sphi 0, %s86
    %s103 = sphi 0, %s87
    %s109 = sphi 0, %s111
    %s112 = sphi 0, %s109
    %s113 = sphi 0, %s112
    %s129 = sphi 0, %s113
  $region4: #{deconv_block.2} parent=0 // loop_header_branch
    %13 = sbr.rel (%p11) target = $region8
  $region5: #{deconv_block.2} parent=0 // loop_body
    %s15 = ssub.s32 %s10, 1
    %s16 = ssub.s32 %s10, 2
    %s23 = sadd.s32 1, %s18
    %p24 = scmp.ge.s32.totalorder %s23, 1
    %s25 = scalar_select %p24, 0, %s23
    %s26 = sadd.s32 1, %s17
    %s27 = scalar_select %p24, %s26, %s17
    %p28 = scmp.ge.s32.totalorder %s27, 2
    %s29 = scalar_select %p28, 0, %s27
    %s30 = sadd.s32 %s17, %s18
    %s31 = sadd.s32 %s29, %s25
    %s32 = ssub.s32 %s30, %s31
    %p33 = scmp.eq.s32.totalorder %s32, 0
    %s35 = sadd.s32 %s34, 1
    %s36 = scalar_select %p33, %s34, %s35
    %p39 = pneg %p33
    %p40 = scmp.eq.s32.totalorder %s10, 1
    %p41 = por %p39, %p40
    %p42 = scmp.ne.s32.totalorder %s34, %s37
    %p43 = scmp.eq.s32.totalorder %s10, 0
    %p44 = por %p42, %p43
    %p45 = scmp.ne.s32.totalorder %s34, %s37
    %p46 = scmp.eq.s32.totalorder %s15, 1
    %p47 = por %p45, %p46
    %p48 = scmp.ne.s32.totalorder %s37, %s38
    %p49 = scmp.eq.s32.totalorder %s15, 0
    %p50 = por %p48, %p49
    %p51 = scmp.ne.s32.totalorder %s37, %s38
    %p52 = scmp.eq.s32.totalorder %s16, 1
    %p53 = por %p51, %p52
    %p55 = scmp.ne.s32.totalorder %s38, %s54
    %p56 = scmp.eq.s32.totalorder %s16, 0
    %p57 = por %p55, %p56
    %s59 = sadd.s32 %s58, 1
    %p62 = scmp.eq.s32.totalorder %s10, 1
    %p63 = scmp.ne.s32.totalorder %s58, %s60
    %p64 = scmp.eq.s32.totalorder %s10, 0
    %p65 = por %p63, %p64
    %p66 = scmp.ne.s32.totalorder %s58, %s60
    %p67 = scmp.eq.s32.totalorder %s15, 1
    %p68 = por %p66, %p67
    %p69 = scmp.ne.s32.totalorder %s60, %s61
    %p70 = scmp.eq.s32.totalorder %s15, 0
    %p71 = por %p69, %p70
    %p72 = scmp.ne.s32.totalorder %s60, %s61
    %p73 = scmp.eq.s32.totalorder %s16, 1
    %p74 = por %p72, %p73
    %p76 = scmp.ne.s32.totalorder %s61, %s75
    %p77 = scmp.eq.s32.totalorder %s16, 0
    %p78 = por %p76, %p77
    %s79 = sadd.s32 %s17, %s18
    %s80 = sadd.s32 %s29, %s25
    %s81 = ssub.s32 %s79, %s80
    %p82 = scmp.eq.s32.totalorder %s81, 0
    %s84 = sadd.s32 %s83, 1
    %s85 = scalar_select %p82, %s83, %s84
    %p88 = pneg %p82
    %p89 = scmp.eq.s32.totalorder %s10, 1
    %p90 = por %p88, %p89
    %p91 = scmp.ne.s32.totalorder %s83, %s86
    %p92 = scmp.eq.s32.totalorder %s10, 0
    %p93 = por %p91, %p92
    %p94 = scmp.ne.s32.totalorder %s83, %s86
    %p95 = scmp.eq.s32.totalorder %s15, 1
    %p96 = por %p94, %p95
    %p97 = scmp.ne.s32.totalorder %s86, %s87
    %p98 = scmp.eq.s32.totalorder %s15, 0
    %p99 = por %p97, %p98
    %p100 = scmp.ne.s32.totalorder %s86, %s87
    %p101 = scmp.eq.s32.totalorder %s16, 1
    %p102 = por %p100, %p101
    %p104 = scmp.ne.s32.totalorder %s87, %s103
    %p105 = scmp.eq.s32.totalorder %s16, 0
    %p106 = por %p104, %p105
    %s107 = ssub.s32 %s17, %s29
    %p108 = scmp.eq.s32.totalorder %s107, 0
    %s110 = sadd.s32 %s109, 1
    %s111 = scalar_select %p108, %s109, %s110
    %p114 = pneg %p108
    %p115 = scmp.eq.s32.totalorder %s10, 1
    %p116 = por %p114, %p115
    %p117 = scmp.ne.s32.totalorder %s109, %s112
    %p118 = scmp.eq.s32.totalorder %s10, 0
    %p119 = por %p117, %p118
    %p120 = scmp.ne.s32.totalorder %s109, %s112
    %p121 = scmp.eq.s32.totalorder %s15, 1
    %p122 = por %p120, %p121
    %p123 = scmp.ne.s32.totalorder %s112, %s113
    %p124 = scmp.eq.s32.totalorder %s15, 0
    %p125 = por %p123, %p124
    %p126 = scmp.ne.s32.totalorder %s112, %s113
    %p127 = scmp.eq.s32.totalorder %s16, 1
    %p128 = por %p126, %p127
    %p130 = scmp.ne.s32.totalorder %s113, %s129
    %p131 = scmp.eq.s32.totalorder %s16, 0
    %p132 = por %p130, %p131
    %p133 = scmp.le.s32.totalorder 1, %s10
    %p134 = scmp.lt.s32.totalorder %s10, 3
    %p135 = pnand %p133, %p134
    %p136 = pneg %p135
    // Predicated region
    $region9: #{deconv_block.2} parent=5 // pred_check
      _
    $region10: #{deconv_block.2} parent=5 // pred_check_branch
      %138 = sbr.rel (%p135) target = $region12
    $region11: #{deconv_block.2} parent=5 // pred_region
      %s139 = ssub.s32 %s10, 1
      // Predicated region
      $region13: #{deconv_block.2} parent=11 // pred_check
        %p140 = pneg %p71
      $region14: #{deconv_block.2} parent=11 // pred_check_branch
        %142 = sbr.rel (%p140) target = $region16
      $region15: #{deconv_block.2} parent=11 // pred_region
        _
      $region16: #{deconv_block.2} parent=11 // pred_fallthru
        _
    $region12: #{deconv_block.2} parent=5 // pred_fallthru
      _
    %p143 = scmp.lt.s32.totalorder %s10, 2
    // Predicated region
    $region17: #{deconv_block.2} parent=5 // pred_check
      %p144 = pneg %p143
    $region18: #{deconv_block.2} parent=5 // pred_check_branch
      %146 = sbr.rel (%p144) target = $region20
    $region19: #{deconv_block.2} parent=5 // pred_region
      // Predicated region
      $region21: #{deconv_block.2} parent=19 // pred_check
        %p147 = pneg %p44
      $region22: #{deconv_block.2} parent=19 // pred_check_branch
        %149 = sbr.rel (%p147) target = $region24
      $region23: #{deconv_block.2} parent=19 // pred_region
        %s150 = sadd.s32 %s17, %s18
        %s151 = smul.u32 32, %s150
        %p152 = scmp.lt.s32.totalorder %s151, 63
        %s153 = scalar_select %p152, %s151, 63
        %s154 = smul.addr %s153, 4
        %s155 = scalar_lea.vmem %s0, %s154
        %s156 = sadd.s32 %s17, %s18
        %s157 = smul.u32 32, %s156
      $region24: #{deconv_block.2} parent=19 // pred_fallthru
        _
    $region20: #{deconv_block.2} parent=5 // pred_fallthru
      _
    %p158 = scmp.le.s32.totalorder 1, %s10
    %p159 = scmp.lt.s32.totalorder %s10, 3
    %p160 = pnand %p158, %p159
    %p161 = pneg %p160
    // Predicated region
    $region25: #{deconv_block.2} parent=5 // pred_check
      _
    $region26: #{deconv_block.2} parent=5 // pred_check_branch
      %163 = sbr.rel (%p160) target = $region28
    $region27: #{deconv_block.2} parent=5 // pred_region
      %s164 = ssub.s32 %s10, 1
      %s165 = sadd.s32 %s19, %s20
      %s166 = smul.u32 32, %s165
      %p167 = scmp.lt.s32.totalorder %s166, 63
      %s168 = scalar_select %p167, %s166, 63
      %s169 = smul.addr %s168, 4
      %s170 = scalar_lea.vmem %s0, %s169
      %p171 = pneg %p50
      %p172 = pneg %p47
      %p173 = pneg %p71
      %p174 = pneg %p68
      %p175 = pneg %p99
      %p176 = pneg %p96
      %s177 = sadd.s32 %s19, %s20
      %s178 = smul.u32 32, %s177
      %p179 = scmp.lt.s32.totalorder %s178, 63
      %s180 = scalar_select %p179, %s178, 63
      %s181 = smul.addr %s180, 4
      %s182 = scalar_lea.vmem %s2, %s181
      %p183 = pneg %p125
      %p184 = pneg %p122
      %s185 = smul.u32 2, %s19
      %p186 = scmp.lt.s32.totalorder %s185, 3
      %s187 = scalar_select %p186, %s185, 3
      %s188 = smul.addr %s187, 8
      %s189 = scalar_lea.vmem %s3, %s188
      %s190 = sadd.s32 %s19, %s20
      %s191 = smul.u32 32, %s190
      %p192 = scmp.lt.s32.totalorder %s191, 63
      %s193 = scalar_select %p192, %s191, 63
      %s194 = smul.addr %s193, 4
      %s195 = scalar_lea.vmem %s0, %s194
      %s196 = sadd.s32 %s19, %s20
      %s197 = smul.u32 32, %s196
      %s198 = sadd.s32 %s19, %s20
      %s199 = smul.u32 32, %s198
      %p200 = scmp.lt.s32.totalorder %s199, 63
      %s201 = scalar_select %p200, %s199, 63
      %s202 = smul.addr %s201, 4
      %s203 = scalar_lea.vmem %s2, %s202
      %s204 = sadd.s32 %s19, %s20
      %s205 = smul.u32 32, %s204
      %s206 = smul.u32 2, %s19
      %p207 = scmp.lt.s32.totalorder %s206, 3
      %s208 = scalar_select %p207, %s206, 3
      %s209 = smul.addr %s208, 8
      %s210 = scalar_lea.vmem %s3, %s209
      %s211 = smul.u32 2, %s19
      %p213 = scmp.eq.s32.totalorder %s20, 0
      // Predicated region
      $region29: #{deconv_block.2} parent=27 // pred_check
        %p214 = pneg %p213
      $region30: #{deconv_block.2} parent=27 // pred_check_branch
        %216 = sbr.rel (%p214) target = $region32
      $region31: #{deconv_block.2} parent=27 // pred_region
        %217 = vst [vmem:[%s210] sm:$0xff] 0.0
        %218 = vst [vmem:[%s210 + $0x8] sm:$0xff] 0.0
      $region32: #{deconv_block.2} parent=27 // pred_fallthru
        _
      %v219 = vld [vmem:[%s195] sm:$0xf]
      %v220 = vld [vmem:[%s195 + $0x4] sm:$0xf]
      %v221 = vld [vmem:[%s195 + $0x8] sm:$0xf]
      %v222 = vld [vmem:[%s195 + $0xc] sm:$0xf]
      %v223 = vld [vmem:[%s195 + $0x10] sm:$0xf]
      %v224 = vld [vmem:[%s195 + $0x14] sm:$0xf]
      %v225 = vld [vmem:[%s195 + $0x18] sm:$0xf]
      %v226 = vld [vmem:[%s195 + $0x1c] sm:$0xf]
      %v227 = vld [vmem:[%s195 + $0x20] sm:$0xf]
      %v228 = vld [vmem:[%s195 + $0x24] sm:$0xf]
      %v229 = vld [vmem:[%s195 + $0x28] sm:$0xf]
      %v230 = vld [vmem:[%s195 + $0x2c] sm:$0xf]
      %v231 = vld [vmem:[%s195 + $0x30] sm:$0xf]
      %v232 = vld [vmem:[%s195 + $0x34] sm:$0xf]
      %v233 = vld [vmem:[%s195 + $0x38] sm:$0xf]
      %v234 = vld [vmem:[%s195 + $0x3c] sm:$0xf]
      %v235 = vld [vmem:[%s195 + $0x40] sm:$0xf]
      %v236 = vld [vmem:[%s195 + $0x44] sm:$0xf]
      %v237 = vld [vmem:[%s195 + $0x48] sm:$0xf]
      %v238 = vld [vmem:[%s195 + $0x4c] sm:$0xf]
      %v239 = vld [vmem:[%s195 + $0x50] sm:$0xf]
      %v240 = vld [vmem:[%s195 + $0x54] sm:$0xf]
      %v241 = vld [vmem:[%s195 + $0x58] sm:$0xf]
      %v242 = vld [vmem:[%s195 + $0x5c] sm:$0xf]
      %v243 = vld [vmem:[%s195 + $0x60] sm:$0xf]
      %v244 = vld [vmem:[%s195 + $0x64] sm:$0xf]
      %v245 = vld [vmem:[%s195 + $0x68] sm:$0xf]
      %v246 = vld [vmem:[%s195 + $0x6c] sm:$0xf]
      %v247 = vld [vmem:[%s195 + $0x70] sm:$0xf]
      %v248 = vld [vmem:[%s195 + $0x74] sm:$0xf]
      %v249 = vld [vmem:[%s195 + $0x78] sm:$0xf]
      %v250 = vld [vmem:[%s195 + $0x7c] sm:$0xf]
      %v251 = vld [vmem:[%s1] sm:$0xf]
      %v252 = vld [vmem:[%s1 + $0x4] sm:$0xf]
      %v285 = vunpack.c.l.b16 %v219
      %v286 = vunpack.c.l.b16 %v220
      %v287 = vunpack.c.l.b16 %v221
      %v288 = vunpack.c.l.b16 %v222
      %v289 = vunpack.c.l.b16 %v223
      %v290 = vunpack.c.l.b16 %v224
      %v291 = vunpack.c.l.b16 %v225
      %v292 = vunpack.c.l.b16 %v226
      %v293 = vunpack.c.l.b16 %v227
      %v294 = vunpack.c.l.b16 %v228
      %v295 = vunpack.c.l.b16 %v229
      %v296 = vunpack.c.l.b16 %v230
      %v297 = vunpack.c.l.b16 %v231
      %v298 = vunpack.c.l.b16 %v232
      %v299 = vunpack.c.l.b16 %v233
      %v300 = vunpack.c.l.b16 %v234
      %v301 = vunpack.c.l.b16 %v235
      %v302 = vunpack.c.l.b16 %v236
      %v303 = vunpack.c.l.b16 %v237
      %v304 = vunpack.c.l.b16 %v238
      %v305 = vunpack.c.l.b16 %v239
      %v306 = vunpack.c.l.b16 %v240
      %v307 = vunpack.c.l.b16 %v241
      %v308 = vunpack.c.l.b16 %v242
      %v309 = vunpack.c.l.b16 %v243
      %v310 = vunpack.c.l.b16 %v244
      %v311 = vunpack.c.l.b16 %v245
      %v312 = vunpack.c.l.b16 %v246
      %v313 = vunpack.c.l.b16 %v247
      %v314 = vunpack.c.l.b16 %v248
      %v315 = vunpack.c.l.b16 %v249
      %v316 = vunpack.c.l.b16 %v250
      %v317 = vpack.c.b16 %v286, %v285
      %v318 = vpack.c.b16 %v288, %v287
      %v319 = vpack.c.b16 %v290, %v289
      %v320 = vpack.c.b16 %v292, %v291
      %v321 = vpack.c.b16 %v294, %v293
      %v322 = vpack.c.b16 %v296, %v295
      %v323 = vpack.c.b16 %v298, %v297
      %v324 = vpack.c.b16 %v300, %v299
      %v325 = vpack.c.b16 %v302, %v301
      %v326 = vpack.c.b16 %v304, %v303
      %v327 = vpack.c.b16 %v306, %v305
      %v328 = vpack.c.b16 %v308, %v307
      %v329 = vpack.c.b16 %v310, %v309
      %v330 = vpack.c.b16 %v312, %v311
      %v331 = vpack.c.b16 %v314, %v313
      %v332 = vpack.c.b16 %v316, %v315
      %v335 = vunpack.c.l.b16 %v251
      %v336 = vunpack.c.l.b16 %v252
      %v337 = vpack.c.b16 %v336, %v335
      %vm339 = vcmask 130048
      %v341 = vsel %vm339, %v317, 0
      %v344 = vsel %vm339, %v318, 0
      %v347 = vsel %vm339, %v319, 0
      %v350 = vsel %vm339, %v320, 0
      %v353 = vsel %vm339, %v321, 0
      %v356 = vsel %vm339, %v322, 0
      %v359 = vsel %vm339, %v323, 0
      %v362 = vsel %vm339, %v324, 0
      %v365 = vsel %vm339, %v325, 0
      %v368 = vsel %vm339, %v326, 0
      %v371 = vsel %vm339, %v327, 0
      %v374 = vsel %vm339, %v328, 0
      %v377 = vsel %vm339, %v329, 0
      %v380 = vsel %vm339, %v330, 0
      %v383 = vsel %vm339, %v331, 0
      %v386 = vsel %vm339, %v332, 0
      %388 = vmatprep.subr.bf16.mxu0 0
      %389 = vmatpush1.bf16.msra.mxu0 %v337
      %390 = vmatprep.subr.bf16.mxu0 0
      %391 = vmatpush1.bf16.msra.mxu0 0
      %392 = vmatprep.subr.bf16.mxu0 0
      %393 = vmatpush1.bf16.msra.mxu0 0
      %394 = vmatprep.subr.bf16.mxu0 0
      %395 = vmatpush1.bf16.msra.mxu0 0
      %396 = vmatprep.subr.bf16.mxu0 0
      %397 = vmatpush1.bf16.msra.mxu0 0
      %398 = vmatprep.subr.bf16.mxu0 0
      %399 = vmatpush1.bf16.msra.mxu0 0
      %400 = vmatprep.subr.bf16.mxu0 0
      %401 = vmatpush1.bf16.msra.mxu0 0
      %402 = vmatprep.subr.bf16.mxu0 0
      %403 = vmatpush1.bf16.msra.mxu0 0
      %404 = vmatprep.subr.bf16.mxu0 0
      %405 = vmatpush1.bf16.msra.mxu0 0
      %406 = vmatprep.subr.bf16.mxu0 0
      %407 = vmatpush1.bf16.msra.mxu0 0
      %408 = vmatprep.subr.bf16.mxu0 0
      %409 = vmatpush1.bf16.msra.mxu0 0
      %410 = vmatprep.subr.bf16.mxu0 0
      %411 = vmatpush1.bf16.msra.mxu0 0
      %412 = vmatprep.subr.bf16.mxu0 0
      %413 = vmatpush1.bf16.msra.mxu0 0
      %414 = vmatprep.subr.bf16.mxu0 0
      %415 = vmatpush1.bf16.msra.mxu0 0
      %416 = vmatprep.subr.bf16.mxu0 0
      %417 = vmatpush1.bf16.msra.mxu0 0
      %418 = vmatprep.subr.bf16.mxu0 0
      %419 = vmatpush1.bf16.msra.mxu0 0
      %420 = vmatprep.mubr.bf16.mxu0 0
      %421 = vmatmul.mubr.bf16.gmra.mrb[0].mxu0 %v341
      %v422 = vpop.f32.mrb[0].mxu0
      %v423 = vadd.f32 0.0, %v422
      %v424 = vpop.f32.mrb[0].mxu0
      %v425 = vpop.f32.mrb[0].mxu0
      %v426 = vadd.f32 0.0, %v425
      %v427 = vpop.f32.mrb[0].mxu0
      %428 = vmatprep.mubr.bf16.mxu0 0
      %429 = vmatmul.mubr.bf16.gmra.mrb[0].mxu0 %v344
      %v430 = vpop.f32.mrb[0].mxu0
      %v431 = vadd.f32 0.0, %v430
      %v432 = vpop.f32.mrb[0].mxu0
      %v433 = vpop.f32.mrb[0].mxu0
      %v434 = vadd.f32 0.0, %v433
      %v435 = vpop.f32.mrb[0].mxu0
      %436 = vmatprep.mubr.bf16.mxu0 0
      %437 = vmatmul.mubr.bf16.gmra.mrb[0].mxu0 %v347
      %v438 = vpop.f32.mrb[0].mxu0
      %v439 = vadd.f32 0.0, %v438
      %v440 = vpop.f32.mrb[0].mxu0
      %v441 = vpop.f32.mrb[0].mxu0
      %v442 = vadd.f32 0.0, %v441
      %v443 = vpop.f32.mrb[0].mxu0
      %444 = vmatprep.mubr.bf16.mxu0 0
      %445 = vmatmul.mubr.bf16.gmra.mrb[0].mxu0 %v350
      %v446 = vpop.f32.mrb[0].mxu0
      %v447 = vadd.f32 0.0, %v446
      %v448 = vpop.f32.mrb[0].mxu0
      %v449 = vpop.f32.mrb[0].mxu0
      %v450 = vadd.f32 0.0, %v449
      %v451 = vpop.f32.mrb[0].mxu0
      %452 = vmatprep.mubr.bf16.mxu0 0
      %453 = vmatmul.mubr.bf16.gmra.mrb[0].mxu0 %v353
      %v454 = vpop.f32.mrb[0].mxu0
      %v455 = vadd.f32 0.0, %v454
      %v456 = vpop.f32.mrb[0].mxu0
      %v457 = vpop.f32.mrb[0].mxu0
      %v458 = vadd.f32 0.0, %v457
      %v459 = vpop.f32.mrb[0].mxu0
      %460 = vmatprep.mubr.bf16.mxu0 0
      %461 = vmatmul.mubr.bf16.gmra.mrb[0].mxu0 %v356
      %v462 = vpop.f32.mrb[0].mxu0
      %v463 = vadd.f32 0.0, %v462
      %v464 = vpop.f32.mrb[0].mxu0
      %v465 = vpop.f32.mrb[0].mxu0
      %v466 = vadd.f32 0.0, %v465
      %v467 = vpop.f32.mrb[0].mxu0
      %468 = vmatprep.mubr.bf16.mxu0 0
      %469 = vmatmul.mubr.bf16.gmra.mrb[0].mxu0 %v359
      %v470 = vpop.f32.mrb[0].mxu0
      %v471 = vadd.f32 0.0, %v470
      %v472 = vpop.f32.mrb[0].mxu0
      %v473 = vpop.f32.mrb[0].mxu0
      %v474 = vadd.f32 0.0, %v473
      %v475 = vpop.f32.mrb[0].mxu0
      %476 = vmatprep.mubr.bf16.mxu0 0
      %477 = vmatmul.mubr.bf16.gmra.mrb[0].mxu0 %v362
      %v478 = vpop.f32.mrb[0].mxu0
      %v479 = vadd.f32 0.0, %v478
      %v480 = vpop.f32.mrb[0].mxu0
      %v481 = vpop.f32.mrb[0].mxu0
      %v482 = vadd.f32 0.0, %v481
      %v483 = vpop.f32.mrb[0].mxu0
      %484 = vmatprep.mubr.bf16.mxu0 0
      %485 = vmatmul.mubr.bf16.gmra.mrb[0].mxu0 %v365
      %v486 = vpop.f32.mrb[0].mxu0
      %v487 = vadd.f32 0.0, %v486
      %v488 = vpop.f32.mrb[0].mxu0
      %v489 = vpop.f32.mrb[0].mxu0
      %v490 = vadd.f32 0.0, %v489
      %v491 = vpop.f32.mrb[0].mxu0
      %492 = vmatprep.mubr.bf16.mxu0 0
      %493 = vmatmul.mubr.bf16.gmra.mrb[0].mxu0 %v368
      %v494 = vpop.f32.mrb[0].mxu0
      %v495 = vadd.f32 0.0, %v494
      %v496 = vpop.f32.mrb[0].mxu0
      %v497 = vpop.f32.mrb[0].mxu0
      %v498 = vadd.f32 0.0, %v497
      %v499 = vpop.f32.mrb[0].mxu0
      %500 = vmatprep.mubr.bf16.mxu0 0
      %501 = vmatmul.mubr.bf16.gmra.mrb[0].mxu0 %v371
      %v502 = vpop.f32.mrb[0].mxu0
      %v503 = vadd.f32 0.0, %v502
      %v504 = vpop.f32.mrb[0].mxu0
      %v505 = vpop.f32.mrb[0].mxu0
      %v506 = vadd.f32 0.0, %v505
      %v507 = vpop.f32.mrb[0].mxu0
      %508 = vmatprep.mubr.bf16.mxu0 0
      %509 = vmatmul.mubr.bf16.gmra.mrb[0].mxu0 %v374
      %v510 = vpop.f32.mrb[0].mxu0
      %v511 = vadd.f32 0.0, %v510
      %v512 = vpop.f32.mrb[0].mxu0
      %v513 = vpop.f32.mrb[0].mxu0
      %v514 = vadd.f32 0.0, %v513
      %v515 = vpop.f32.mrb[0].mxu0
      %516 = vmatprep.mubr.bf16.mxu0 0
      %517 = vmatmul.mubr.bf16.gmra.mrb[0].mxu0 %v377
      %v518 = vpop.f32.mrb[0].mxu0
      %v519 = vadd.f32 0.0, %v518
      %v520 = vpop.f32.mrb[0].mxu0
      %v521 = vpop.f32.mrb[0].mxu0
      %v522 = vadd.f32 0.0, %v521
      %v523 = vpop.f32.mrb[0].mxu0
      %524 = vmatprep.mubr.bf16.mxu0 0
      %525 = vmatmul.mubr.bf16.gmra.mrb[0].mxu0 %v380
      %v526 = vpop.f32.mrb[0].mxu0
      %v527 = vadd.f32 0.0, %v526
      %v528 = vpop.f32.mrb[0].mxu0
      %v529 = vpop.f32.mrb[0].mxu0
      %v530 = vadd.f32 0.0, %v529
      %v531 = vpop.f32.mrb[0].mxu0
      %532 = vmatprep.mubr.bf16.mxu0 0
      %533 = vmatmul.mubr.bf16.gmra.mrb[0].mxu0 %v383
      %v534 = vpop.f32.mrb[0].mxu0
      %v535 = vadd.f32 0.0, %v534
      %v536 = vpop.f32.mrb[0].mxu0
      %v537 = vpop.f32.mrb[0].mxu0
      %v538 = vadd.f32 0.0, %v537
      %v539 = vpop.f32.mrb[0].mxu0
      %540 = vmatprep.mubr.bf16.mxu0 0
      %541 = vmatmul.mubr.bf16.gmra.mrb[0].mxu0 %v386
      %v542 = vpop.f32.mrb[0].mxu0
      %v543 = vadd.f32 0.0, %v542
      %v544 = vpop.f32.mrb[0].mxu0
      %v545 = vpop.f32.mrb[0].mxu0
      %v546 = vadd.f32 0.0, %v545
      %v547 = vpop.f32.mrb[0].mxu0
      %548 = vdwg.mxu0
      %v549 = vpack.c.bf16 %v426, %v423
      %v550 = vpack.c.bf16 %v434, %v431
      %v551 = vpack.c.bf16 %v442, %v439
      %v552 = vpack.c.bf16 %v450, %v447
      %v553 = vpack.c.bf16 %v458, %v455
      %v554 = vpack.c.bf16 %v466, %v463
      %v555 = vpack.c.bf16 %v474, %v471
      %v556 = vpack.c.bf16 %v482, %v479
      %v557 = vpack.c.bf16 %v490, %v487
      %v558 = vpack.c.bf16 %v498, %v495
      %v559 = vpack.c.bf16 %v506, %v503
      %v560 = vpack.c.bf16 %v514, %v511
      %v561 = vpack.c.bf16 %v522, %v519
      %v562 = vpack.c.bf16 %v530, %v527
      %v563 = vpack.c.bf16 %v538, %v535
      %v564 = vpack.c.bf16 %v546, %v543
      %v581 = vunpack.c.l.b16 %v549
      %v582 = vunpack.c.h.b16 %v549
      %v583 = vunpack.c.l.b16 %v550
      %v584 = vunpack.c.h.b16 %v550
      %v585 = vunpack.c.l.b16 %v551
      %v586 = vunpack.c.h.b16 %v551
      %v587 = vunpack.c.l.b16 %v552
      %v588 = vunpack.c.h.b16 %v552
      %v589 = vunpack.c.l.b16 %v553
      %v590 = vunpack.c.h.b16 %v553
      %v591 = vunpack.c.l.b16 %v554
      %v592 = vunpack.c.h.b16 %v554
      %v593 = vunpack.c.l.b16 %v555
      %v594 = vunpack.c.h.b16 %v555
      %v595 = vunpack.c.l.b16 %v556
      %v596 = vunpack.c.h.b16 %v556
      %v597 = vunpack.c.l.b16 %v557
      %v598 = vunpack.c.h.b16 %v557
      %v599 = vunpack.c.l.b16 %v558
      %v600 = vunpack.c.h.b16 %v558
      %v601 = vunpack.c.l.b16 %v559
      %v602 = vunpack.c.h.b16 %v559
      %v603 = vunpack.c.l.b16 %v560
      %v604 = vunpack.c.h.b16 %v560
      %v605 = vunpack.c.l.b16 %v561
      %v606 = vunpack.c.h.b16 %v561
      %v607 = vunpack.c.l.b16 %v562
      %v608 = vunpack.c.h.b16 %v562
      %v609 = vunpack.c.l.b16 %v563
      %v610 = vunpack.c.h.b16 %v563
      %v611 = vunpack.c.l.b16 %v564
      %v612 = vunpack.c.h.b16 %v564
      %v613 = vpack.c.b16 %v581, %v581
      %v614 = vpack.c.b16 %v582, %v582
      %v615 = vpack.c.b16 %v583, %v583
      %v616 = vpack.c.b16 %v584, %v584
      %v617 = vpack.c.b16 %v585, %v585
      %v618 = vpack.c.b16 %v586, %v586
      %v619 = vpack.c.b16 %v587, %v587
      %v620 = vpack.c.b16 %v588, %v588
      %v621 = vpack.c.b16 %v589, %v589
      %v622 = vpack.c.b16 %v590, %v590
      %v623 = vpack.c.b16 %v591, %v591
      %v624 = vpack.c.b16 %v592, %v592
      %v625 = vpack.c.b16 %v593, %v593
      %v626 = vpack.c.b16 %v594, %v594
      %v627 = vpack.c.b16 %v595, %v595
      %v628 = vpack.c.b16 %v596, %v596
      %v629 = vpack.c.b16 %v597, %v597
      %v630 = vpack.c.b16 %v598, %v598
      %v631 = vpack.c.b16 %v599, %v599
      %v632 = vpack.c.b16 %v600, %v600
      %v633 = vpack.c.b16 %v601, %v601
      %v634 = vpack.c.b16 %v602, %v602
      %v635 = vpack.c.b16 %v603, %v603
      %v636 = vpack.c.b16 %v604, %v604
      %v637 = vpack.c.b16 %v605, %v605
      %v638 = vpack.c.b16 %v606, %v606
      %v639 = vpack.c.b16 %v607, %v607
      %v640 = vpack.c.b16 %v608, %v608
      %v641 = vpack.c.b16 %v609, %v609
      %v642 = vpack.c.b16 %v610, %v610
      %v643 = vpack.c.b16 %v611, %v611
      %v644 = vpack.c.b16 %v612, %v612
      %677 = vst [vmem:[%s203] sm:$0xf] %v613
      %678 = vst [vmem:[%s203 + $0x4] sm:$0xf] %v614
      %679 = vst [vmem:[%s203 + $0x8] sm:$0xf] %v615
      %680 = vst [vmem:[%s203 + $0xc] sm:$0xf] %v616
      %681 = vst [vmem:[%s203 + $0x10] sm:$0xf] %v617
      %682 = vst [vmem:[%s203 + $0x14] sm:$0xf] %v618
      %683 = vst [vmem:[%s203 + $0x18] sm:$0xf] %v619
      %684 = vst [vmem:[%s203 + $0x1c] sm:$0xf] %v620
      %685 = vst [vmem:[%s203 + $0x20] sm:$0xf] %v621
      %686 = vst [vmem:[%s203 + $0x24] sm:$0xf] %v622
      %687 = vst [vmem:[%s203 + $0x28] sm:$0xf] %v623
      %688 = vst [vmem:[%s203 + $0x2c] sm:$0xf] %v624
      %689 = vst [vmem:[%s203 + $0x30] sm:$0xf] %v625
      %690 = vst [vmem:[%s203 + $0x34] sm:$0xf] %v626
      %691 = vst [vmem:[%s203 + $0x38] sm:$0xf] %v627
      %692 = vst [vmem:[%s203 + $0x3c] sm:$0xf] %v628
      %693 = vst [vmem:[%s203 + $0x40] sm:$0xf] %v629
      %694 = vst [vmem:[%s203 + $0x44] sm:$0xf] %v630
      %695 = vst [vmem:[%s203 + $0x48] sm:$0xf] %v631
      %696 = vst [vmem:[%s203 + $0x4c] sm:$0xf] %v632
      %697 = vst [vmem:[%s203 + $0x50] sm:$0xf] %v633
      %698 = vst [vmem:[%s203 + $0x54] sm:$0xf] %v634
      %699 = vst [vmem:[%s203 + $0x58] sm:$0xf] %v635
      %700 = vst [vmem:[%s203 + $0x5c] sm:$0xf] %v636
      %701 = vst [vmem:[%s203 + $0x60] sm:$0xf] %v637
      %702 = vst [vmem:[%s203 + $0x64] sm:$0xf] %v638
      %703 = vst [vmem:[%s203 + $0x68] sm:$0xf] %v639
      %704 = vst [vmem:[%s203 + $0x6c] sm:$0xf] %v640
      %705 = vst [vmem:[%s203 + $0x70] sm:$0xf] %v641
      %706 = vst [vmem:[%s203 + $0x74] sm:$0xf] %v642
      %707 = vst [vmem:[%s203 + $0x78] sm:$0xf] %v643
      %708 = vst [vmem:[%s203 + $0x7c] sm:$0xf] %v644
      %v709 = vld [vmem:[%s210] sm:$0xff]
      %v710 = vadd.f32 %v423, %v426
      %v711 = vadd.f32 %v710, %v431
      %v712 = vadd.f32 %v711, %v434
      %v713 = vadd.f32 %v712, %v439
      %v714 = vadd.f32 %v713, %v442
      %v715 = vadd.f32 %v714, %v447
      %v716 = vadd.f32 %v715, %v450
      %v717 = vadd.f32 %v716, %v455
      %v718 = vadd.f32 %v717, %v458
      %v719 = vadd.f32 %v718, %v463
      %v720 = vadd.f32 %v719, %v466
      %v721 = vadd.f32 %v720, %v471
      %v722 = vadd.f32 %v721, %v474
      %v723 = vadd.f32 %v722, %v479
      %v724 = vadd.f32 %v723, %v482
      %v725 = vadd.f32 %v724, %v487
      %v726 = vadd.f32 %v725, %v490
      %v727 = vadd.f32 %v726, %v495
      %v728 = vadd.f32 %v727, %v498
      %v729 = vadd.f32 %v728, %v503
      %v730 = vadd.f32 %v729, %v506
      %v731 = vadd.f32 %v730, %v511
      %v732 = vadd.f32 %v731, %v514
      %v733 = vadd.f32 %v732, %v519
      %v734 = vadd.f32 %v733, %v522
      %v735 = vadd.f32 %v734, %v527
      %v736 = vadd.f32 %v735, %v530
      %v737 = vadd.f32 %v736, %v535
      %v738 = vadd.f32 %v737, %v538
      %v739 = vadd.f32 %v738, %v543
      %v740 = vadd.f32 %v739, %v546
      %v741 = vadd.f32 %v709, %v740
      %742 = vst [vmem:[%s210] sm:$0xff] %v741
      %v743 = vld [vmem:[%s210 + $0x8] sm:$0xff]
      %v744 = vmul.f32 %v423, %v423
      %v745 = vmul.f32 %v426, %v426
      %v746 = vmul.f32 %v431, %v431
      %v747 = vmul.f32 %v434, %v434
      %v748 = vmul.f32 %v439, %v439
      %v749 = vmul.f32 %v442, %v442
      %v750 = vmul.f32 %v447, %v447
      %v751 = vmul.f32 %v450, %v450
      %v752 = vmul.f32 %v455, %v455
      %v753 = vmul.f32 %v458, %v458
      %v754 = vmul.f32 %v463, %v463
      %v755 = vmul.f32 %v466, %v466
      %v756 = vmul.f32 %v471, %v471
      %v757 = vmul.f32 %v474, %v474
      %v758 = vmul.f32 %v479, %v479
      %v759 = vmul.f32 %v482, %v482
      %v760 = vmul.f32 %v487, %v487
      %v761 = vmul.f32 %v490, %v490
      %v762 = vmul.f32 %v495, %v495
      %v763 = vmul.f32 %v498, %v498
      %v764 = vmul.f32 %v503, %v503
      %v765 = vmul.f32 %v506, %v506
      %v766 = vmul.f32 %v511, %v511
      %v767 = vmul.f32 %v514, %v514
      %v768 = vmul.f32 %v519, %v519
      %v769 = vmul.f32 %v522, %v522
      %v770 = vmul.f32 %v527, %v527
      %v771 = vmul.f32 %v530, %v530
      %v772 = vmul.f32 %v535, %v535
      %v773 = vmul.f32 %v538, %v538
      %v774 = vmul.f32 %v543, %v543
      %v775 = vmul.f32 %v546, %v546
      %v776 = vadd.f32 %v744, %v745
      %v777 = vadd.f32 %v776, %v746
      %v778 = vadd.f32 %v777, %v747
      %v779 = vadd.f32 %v778, %v748
      %v780 = vadd.f32 %v779, %v749
      %v781 = vadd.f32 %v780, %v750
      %v782 = vadd.f32 %v781, %v751
      %v783 = vadd.f32 %v782, %v752
      %v784 = vadd.f32 %v783, %v753
      %v785 = vadd.f32 %v784, %v754
      %v786 = vadd.f32 %v785, %v755
      %v787 = vadd.f32 %v786, %v756
      %v788 = vadd.f32 %v787, %v757
      %v789 = vadd.f32 %v788, %v758
      %v790 = vadd.f32 %v789, %v759
      %v791 = vadd.f32 %v790, %v760
      %v792 = vadd.f32 %v791, %v761
      %v793 = vadd.f32 %v792, %v762
      %v794 = vadd.f32 %v793, %v763
      %v795 = vadd.f32 %v794, %v764
      %v796 = vadd.f32 %v795, %v765
      %v797 = vadd.f32 %v796, %v766
      %v798 = vadd.f32 %v797, %v767
      %v799 = vadd.f32 %v798, %v768
      %v800 = vadd.f32 %v799, %v769
      %v801 = vadd.f32 %v800, %v770
      %v802 = vadd.f32 %v801, %v771
      %v803 = vadd.f32 %v802, %v772
      %v804 = vadd.f32 %v803, %v773
      %v805 = vadd.f32 %v804, %v774
      %v806 = vadd.f32 %v805, %v775
      %v807 = vadd.f32 %v743, %v806
      %808 = vst [vmem:[%s210 + $0x8] sm:$0xff] %v807
      %s809 = sadd.s32 %s19, %s20
      %s810 = smul.u32 32, %s809
      %p811 = scmp.lt.s32.totalorder %s810, 63
      %s812 = scalar_select %p811, %s810, 63
      %s813 = smul.addr %s812, 4
      %s814 = scalar_lea.vmem %s2, %s813
      %s815 = smul.u32 2, %s19
      %p816 = scmp.lt.s32.totalorder %s815, 3
      %s817 = scalar_select %p816, %s815, 3
      %s818 = smul.addr %s817, 8
      %s819 = scalar_lea.vmem %s3, %s818
      // Predicated region
      $region33: #{deconv_block.2} parent=27 // pred_check
        %p820 = pneg %p96
      $region34: #{deconv_block.2} parent=27 // pred_check_branch
        %822 = sbr.rel (%p820) target = $region36
      $region35: #{deconv_block.2} parent=27 // pred_region
        %s823 = sadd.s32 %s19, %s20
        %s824 = smul.u32 32, %s823
      $region36: #{deconv_block.2} parent=27 // pred_fallthru
        _
      // Predicated region
      $region37: #{deconv_block.2} parent=27 // pred_check
        %p825 = pneg %p122
      $region38: #{deconv_block.2} parent=27 // pred_check_branch
        %827 = sbr.rel (%p825) target = $region40
      $region39: #{deconv_block.2} parent=27 // pred_region
        %s828 = smul.u32 2, %s19
      $region40: #{deconv_block.2} parent=27 // pred_fallthru
        _
    $region28: #{deconv_block.2} parent=5 // pred_fallthru
      _
    %p829 = scmp.le.s32.totalorder 2, %s10
    // Predicated region
    $region41: #{deconv_block.2} parent=5 // pred_check
      %p830 = pneg %p829
    $region42: #{deconv_block.2} parent=5 // pred_check_branch
      %832 = sbr.rel (%p830) target = $region44
    $region43: #{deconv_block.2} parent=5 // pred_region
      %s833 = ssub.s32 %s10, 2
      // Predicated region
      $region45: #{deconv_block.2} parent=43 // pred_check
        %p834 = pneg %p102
      $region46: #{deconv_block.2} parent=43 // pred_check_branch
        %836 = sbr.rel (%p834) target = $region48
      $region47: #{deconv_block.2} parent=43 // pred_region
        %s837 = sadd.s32 %s21, %s22
        %s838 = smul.u32 32, %s837
        %p839 = scmp.lt.s32.totalorder %s838, 63
        %s840 = scalar_select %p839, %s838, 63
        %s841 = smul.addr %s840, 4
        %s842 = scalar_lea.vmem %s2, %s841
      $region48: #{deconv_block.2} parent=43 // pred_fallthru
        _
      // Predicated region
      $region49: #{deconv_block.2} parent=43 // pred_check
        %p843 = pneg %p128
      $region50: #{deconv_block.2} parent=43 // pred_check_branch
        %845 = sbr.rel (%p843) target = $region52
      $region51: #{deconv_block.2} parent=43 // pred_region
        %s846 = smul.u32 2, %s21
        %p847 = scmp.lt.s32.totalorder %s846, 3
        %s848 = scalar_select %p847, %s846, 3
        %s849 = smul.addr %s848, 8
        %s850 = scalar_lea.vmem %s3, %s849
      $region52: #{deconv_block.2} parent=43 // pred_fallthru
        _
    $region44: #{deconv_block.2} parent=5 // pred_fallthru
      _
  $region6: #{deconv_block.2} parent=0 // loop_footer
    %s14 = sadd.s32 1, %s10
  $region7: #{deconv_block.2} parent=0 // loop_footer_branch
    %9 = sbr.rel target = $region3
  $region8: #{deconv_block.2} parent=0 // loop_exit
    _

</llo_original>
